<compile_context>
chip_gen: v7x
topology: tpu7x:2x2x1
jax: 0.10.0
libtpu: 0.0.40
codegen_flags: <defaults>
</compile_context>

<pallas_src>
import jax
import jax.numpy as jnp
from jax.experimental import pallas as pl
from jax.experimental.pallas import tpu as pltpu


# ----------------------------------------------------------------------------
# Pallas kernel: whole forward pass in one program (layout: B x T x C, lanes=C)
# ----------------------------------------------------------------------------
def _cnn_kernel(x_ref,                                   # (B, T, Cin)
                s1m_ref, s1p_ref,                        # (T, T) conv1 t-1 / t+1 shifts
                sele_ref, selo_ref,                      # (L, T) pool even / odd row picks
                s2m_ref, s2p_ref,                        # (L, L) conv2 t-1 / t+1 shifts
                w1_ref, b1_ref, g1_ref, be1_ref,         # conv1: (3*Cin,16), (1,16)x3
                w2_ref, b2_ref, g2_ref, be2_ref,         # conv2: (48,32), (1,32)x3
                wf1_ref, bf1_ref,                        # fc1: (L*32,64), (1,64)
                wf2_ref, bf2_ref,                        # fc2: (64,NC), (1,NC)
                out_ref):                                # (B, NC)
    x = x_ref[...]                                       # (B, T, Cin) f32
    B, T, Cin = x.shape
    L = T // 2
    eps = 1e-5

    def bsel(sel, a):
        # Constant 0/1 row-selection / row-shift applied per batch on the MXU.
        # sel: (R, S) host-precomputed; a: (B, S, C) -> (B, R, C).  Exact
        # (each output row is 1*x + 0*rest), so it is a pure data-movement op
        # run on the idle MXU instead of the contended VALU/XLU.
        sel_b = jnp.broadcast_to(sel, (a.shape[0],) + sel.shape)
        return jnp.einsum('brs,bsc->brc', sel_b, a,
                          preferred_element_type=jnp.float32)

    def conv_bn_relu(a, sm_ref, sp_ref, w_ref, bias, gamma, beta):
        # a: (N, M, Ci). Conv1d(k=3, pad=1) as ONE im2col matmul (K = 3*Ci);
        # the shifted taps come from constant shift matrices (boundary zeros
        # baked in).  Training-mode BatchNorm stats via ones-vector matmuls
        # (MXU) instead of cross-sublane reductions (XLU), then ReLU.
        N, M, Ci = a.shape
        co = w_ref.shape[1]
        a_m1 = bsel(sm_ref[...], a)                       # a[:, t-1, :], zero at t=0
        a_p1 = bsel(sp_ref[...], a)                       # a[:, t+1, :], zero at t=M-1
        cat = jnp.concatenate([a_m1, a, a_p1], axis=2).reshape(N * M, 3 * Ci)
        y = jnp.dot(cat, w_ref[...],
                    preferred_element_type=jnp.float32) + bias        # (N*M, co)
        ones_row = jnp.ones((1, N * M), jnp.float32)      # splat, not iota/where
        inv_n = 1.0 / (N * M)
        mean = jnp.dot(ones_row, y, preferred_element_type=jnp.float32) * inv_n
        ex2 = jnp.dot(ones_row, y * y, preferred_element_type=jnp.float32) * inv_n
        var = jnp.maximum(ex2 - mean * mean, 0.0)         # guard f32 cancellation
        scale = jax.lax.rsqrt(var + eps) * gamma
        z = jnp.maximum((y - mean) * scale + beta, 0.0)
        return z.reshape(N, M, co)

    # --- conv1 + bn1 + relu ---------------------------------------- (B, T, 16)
    h = conv_bn_relu(x, s1m_ref, s1p_ref, w1_ref,
                     b1_ref[...], g1_ref[...], be1_ref[...])

    # --- MaxPool1d(kernel_size=2, stride=2) ------------------------ (B, L, 16)
    # batch-factored constant selections (L, T): pick even / odd time rows per
    # batch on the MXU, then elementwise max.  O(B*L*T*C) and linear in B.
    h = jnp.maximum(bsel(sele_ref[...], h), bsel(selo_ref[...], h))

    # --- conv2 + bn2 + relu ---------------------------------------- (B, L, 32)
    h = conv_bn_relu(h, s2m_ref, s2p_ref, w2_ref,
                     b2_ref[...], g2_ref[...], be2_ref[...])

    # --- flatten to PyTorch's x.view(B, -1) order (baked into wf1), fc1 + relu.
    # L = 8 lane-placed slices; minor XLU cost at this size (a two-contracting-
    # dim dot_general would remove it but is not a supported Mosaic matmul).
    hf = jnp.concatenate([h[:, l:l + 1, :] for l in range(L)],
                         axis=2).reshape(B, L * 32)
    z = jnp.maximum(
        jnp.dot(hf, wf1_ref[...], preferred_element_type=jnp.float32)
        + bf1_ref[...], 0.0)

    # --- fc2 (NC=3 -> masked store; fine, stores are not the bottleneck) ------
    out_ref[...] = (jnp.dot(z, wf2_ref[...], preferred_element_type=jnp.float32)
                    + bf2_ref[...])


# ----------------------------------------------------------------------------
# One-time parameter / constant re-layout (hoisted out of the per-call path)
# ----------------------------------------------------------------------------
def prepare_params(p):
    """Re-layout PyTorch-style params + build constant selection matrices.

    conv taps are stacked along K (row = k*Cin + cin) matching the in-kernel
    im2col [x[t-1] | x[t] | x[t+1]].  fc1 columns (PyTorch flatten index
    c*L + l) are permuted to the kernel's l*32 + c.  Shift / pooling selection
    matrices are built HERE so the kernel never generates constants.
    """
    f32 = jnp.float32
    cin = p["conv1_w"].shape[1]
    L = p["fc1_w"].shape[1] // 32
    T = 2 * L
    nc = p["fc2_w"].shape[0]

    w1 = jnp.transpose(p["conv1_w"], (2, 1, 0)).reshape(3 * cin, 16).astype(f32)
    w2 = jnp.transpose(p["conv2_w"], (2, 1, 0)).reshape(3 * 16, 32).astype(f32)
    wf1 = jnp.transpose(p["fc1_w"].reshape(64, 32, L),
                        (2, 1, 0)).reshape(L * 32, 64).astype(f32)
    wf2 = jnp.transpose(p["fc2_w"], (1, 0)).astype(f32)

    # constant 0/1 matrices (exact selections; zero rows encode padding)
    s1m = jnp.eye(T, T, k=-1, dtype=f32)     # row t picks t-1 (row 0 = zeros)
    s1p = jnp.eye(T, T, k=+1, dtype=f32)     # row t picks t+1 (row T-1 = zeros)
    s2m = jnp.eye(L, L, k=-1, dtype=f32)
    s2p = jnp.eye(L, L, k=+1, dtype=f32)
    l_idx = jnp.arange(L)
    sele = jnp.zeros((L, T), f32).at[l_idx, 2 * l_idx].set(1.0)      # t = 2l
    selo = jnp.zeros((L, T), f32).at[l_idx, 2 * l_idx + 1].set(1.0)  # t = 2l+1

    return (s1m, s1p, sele, selo, s2m, s2p,
            w1, p["conv1_b"].reshape(1, 16).astype(f32),
            p["bn1_g"].reshape(1, 16).astype(f32),
            p["bn1_b"].reshape(1, 16).astype(f32),
            w2, p["conv2_b"].reshape(1, 32).astype(f32),
            p["bn2_g"].reshape(1, 32).astype(f32),
            p["bn2_b"].reshape(1, 32).astype(f32),
            wf1, p["fc1_b"].reshape(1, 64).astype(f32),
            wf2, p["fc2_b"].reshape(1, nc).astype(f32))


def cnn_forward_pallas(x_nct, prepped):
    """x_nct: (B, C, T) float32 (PyTorch layout). prepped: prepare_params(...).

    The NCL->NLC transpose stays in the wrapper (negligible at this size;
    callers that already hold NLC data can skip it entirely).
    """
    B, C, T = x_nct.shape
    nc = prepped[-1].shape[1]
    x_nlc = jnp.transpose(x_nct, (0, 2, 1))              # lanes = channels
    args = (x_nlc,) + tuple(prepped)

    # No grid: single whole-array blocks resident in VMEM (avoids the 1-step
    # pipeline prologue/epilogue).  Footprint is a few KB, far under the
    # 32 MiB scoped default on every generation (incl. v7x's 64 MiB VMEM).
    vmem_spec = pl.BlockSpec(memory_space=pltpu.MemorySpace.VMEM)
    return pl.pallas_call(
        _cnn_kernel,
        out_shape=jax.ShapeDtypeStruct((B, nc), jnp.float32),
        in_specs=[vmem_spec] * len(args),
        out_specs=vmem_spec,
    )(*args)


# ----------------------------------------------------------------------------
# Pure-JAX reference in PyTorch (NCL) layout, for a numeric sanity check.
# ----------------------------------------------------------------------------
def cnn_forward_reference(x_nct, p):
    def conv1d(x, w, b):
        y = jax.lax.conv_general_dilated(
            x, w, window_strides=(1,), padding=((1, 1),),
            dimension_numbers=("NCH", "OIH", "NCH"))
        return y + b[None, :, None]

    def bn_train(x, g, b, eps=1e-5):
        mean = x.mean(axis=(0, 2), keepdims=True)
        var = jnp.square(x - mean).mean(axis=(0, 2), keepdims=True)
        return (x - mean) / jnp.sqrt(var + eps) * g[None, :, None] + b[None, :, None]

    h = jax.nn.relu(bn_train(conv1d(x_nct, p["conv1_w"], p["conv1_b"]),
                             p["bn1_g"], p["bn1_b"]))
    B, C, T = h.shape
    h = h.reshape(B, C, T // 2, 2).max(axis=-1)
    h = jax.nn.relu(bn_train(conv1d(h, p["conv2_w"], p["conv2_b"]),
                             p["bn2_g"], p["bn2_b"]))
    h = h.reshape(B, -1)
    h = jax.nn.relu(h @ p["fc1_w"].T + p["fc1_b"])
    return h @ p["fc2_w"].T + p["fc2_b"]


def make_params(key, num_channels, num_samples, num_classes):
    L = num_samples // 2
    ks = jax.random.split(key, 8)
    f32 = jnp.float32
    return dict(
        conv1_w=jax.random.normal(ks[0], (16, num_channels, 3), f32) * 0.2,
        conv1_b=jax.random.normal(ks[1], (16,), f32) * 0.1,
        bn1_g=jnp.ones((16,), f32),
        bn1_b=jnp.zeros((16,), f32),
        conv2_w=jax.random.normal(ks[2], (32, 16, 3), f32) * 0.1,
        conv2_b=jax.random.normal(ks[3], (32,), f32) * 0.1,
        bn2_g=jnp.ones((32,), f32),
        bn2_b=jnp.zeros((32,), f32),
        fc1_w=jax.random.normal(ks[4], (64, 32 * L), f32) * 0.05,
        fc1_b=jax.random.normal(ks[5], (64,), f32) * 0.05,
        fc2_w=jax.random.normal(ks[6], (num_classes, 64), f32) * 0.1,
        fc2_b=jax.random.normal(ks[7], (num_classes,), f32) * 0.1,
    )


if __name__ == "__main__":
    batch, num_channels, num_samples, num_classes = 2, 4, 16, 3

    key = jax.random.PRNGKey(0)
    kx, kp = jax.random.split(key)
    x = jax.random.normal(kx, (batch, num_channels, num_samples), jnp.float32)
    params = make_params(kp, num_channels, num_samples, num_classes)

    prepped = prepare_params(params)          # one-time relayout (hoisted)

    out = jax.block_until_ready(cnn_forward_pallas(x, prepped))
    ref = jax.block_until_ready(cnn_forward_reference(x, params))

    assert out.shape == (batch, num_classes)
    assert jnp.allclose(out, ref, rtol=1e-3, atol=1e-3), (out, ref)

    print("KERNEL_OK")
</pallas_src>

<mosaic_0001>
module attributes {stable_mosaic.version = 11 : i64} {
  func.func @_cnn_kernel(%arg0: memref<2x16x4xf32, #tpu.memory_space<vmem>>, %arg1: memref<16x16xf32, #tpu.memory_space<vmem>>, %arg2: memref<16x16xf32, #tpu.memory_space<vmem>>, %arg3: memref<8x16xf32, #tpu.memory_space<vmem>>, %arg4: memref<8x16xf32, #tpu.memory_space<vmem>>, %arg5: memref<8x8xf32, #tpu.memory_space<vmem>>, %arg6: memref<8x8xf32, #tpu.memory_space<vmem>>, %arg7: memref<12x16xf32, #tpu.memory_space<vmem>>, %arg8: memref<1x16xf32, #tpu.memory_space<vmem>>, %arg9: memref<1x16xf32, #tpu.memory_space<vmem>>, %arg10: memref<1x16xf32, #tpu.memory_space<vmem>>, %arg11: memref<48x32xf32, #tpu.memory_space<vmem>>, %arg12: memref<1x32xf32, #tpu.memory_space<vmem>>, %arg13: memref<1x32xf32, #tpu.memory_space<vmem>>, %arg14: memref<1x32xf32, #tpu.memory_space<vmem>>, %arg15: memref<256x64xf32, #tpu.memory_space<vmem>>, %arg16: memref<1x64xf32, #tpu.memory_space<vmem>>, %arg17: memref<64x3xf32, #tpu.memory_space<vmem>>, %arg18: memref<1x3xf32, #tpu.memory_space<vmem>>, %arg19: memref<2x3xf32, #tpu.memory_space<vmem>>) attributes {dimension_semantics = [], scalar_prefetch = 0 : i64, scratch_operands = 0 : i64, tpu.core_type = #tpu.core_type<tc>} {
    %c0 = arith.constant 0 : index
    %c0_0 = arith.constant 0 : index
    %c0_1 = arith.constant 0 : index
    %0 = vector.load %arg0[%c0, %c0_0, %c0_1] : memref<2x16x4xf32, #tpu.memory_space<vmem>>, vector<2x16x4xf32>
    %c0_2 = arith.constant 0 : index
    %c0_3 = arith.constant 0 : index
    %1 = vector.load %arg8[%c0_2, %c0_3] : memref<1x16xf32, #tpu.memory_space<vmem>>, vector<1x16xf32>
    %c0_4 = arith.constant 0 : index
    %c0_5 = arith.constant 0 : index
    %2 = vector.load %arg9[%c0_4, %c0_5] : memref<1x16xf32, #tpu.memory_space<vmem>>, vector<1x16xf32>
    %c0_6 = arith.constant 0 : index
    %c0_7 = arith.constant 0 : index
    %3 = vector.load %arg10[%c0_6, %c0_7] : memref<1x16xf32, #tpu.memory_space<vmem>>, vector<1x16xf32>
    %c0_8 = arith.constant 0 : index
    %c0_9 = arith.constant 0 : index
    %4 = vector.load %arg1[%c0_8, %c0_9] : memref<16x16xf32, #tpu.memory_space<vmem>>, vector<16x16xf32>
    %5 = vector.shape_cast %4 : vector<16x16xf32> to vector<1x16x16xf32>
    %6 = vector.broadcast %5 : vector<1x16x16xf32> to vector<2x16x16xf32>
    "tpu.trace_start"() <{level = 10 : i32, message = "brs,bsc->brc"}> : () -> ()
    %cst = arith.constant dense<0.000000e+00> : vector<2x16x4xf32>
    %7 = tpu.matmul %6, %0, %cst {dimension_numbers = #tpu.dot_dimension_numbers<[2], [1], [1], [2], [0, 0, 0, 1, 1, 2], [0], [0]>} : vector<2x16x16xf32>, vector<2x16x4xf32>, vector<2x16x4xf32> -> vector<2x16x4xf32>
    "tpu.trace_stop"() : () -> ()
    %c0_10 = arith.constant 0 : index
    %c0_11 = arith.constant 0 : index
    %8 = vector.load %arg2[%c0_10, %c0_11] : memref<16x16xf32, #tpu.memory_space<vmem>>, vector<16x16xf32>
    %9 = vector.shape_cast %8 : vector<16x16xf32> to vector<1x16x16xf32>
    %10 = vector.broadcast %9 : vector<1x16x16xf32> to vector<2x16x16xf32>
    "tpu.trace_start"() <{level = 10 : i32, message = "brs,bsc->brc"}> : () -> ()
    %cst_12 = arith.constant dense<0.000000e+00> : vector<2x16x4xf32>
    %11 = tpu.matmul %10, %0, %cst_12 {dimension_numbers = #tpu.dot_dimension_numbers<[2], [1], [1], [2], [0, 0, 0, 1, 1, 2], [0], [0]>} : vector<2x16x16xf32>, vector<2x16x4xf32>, vector<2x16x4xf32> -> vector<2x16x4xf32>
    "tpu.trace_stop"() : () -> ()
    %12 = tpu.concatenate %7, %0, %11 in 2 : vector<2x16x4xf32>, vector<2x16x4xf32>, vector<2x16x4xf32> -> vector<2x16x12xf32>
    %13 = vector.shape_cast %12 : vector<2x16x12xf32> to vector<32x12xf32>
    %c0_13 = arith.constant 0 : index
    %c0_14 = arith.constant 0 : index
    %14 = vector.load %arg7[%c0_13, %c0_14] : memref<12x16xf32, #tpu.memory_space<vmem>>, vector<12x16xf32>
    %cst_15 = arith.constant dense<0.000000e+00> : vector<32x16xf32>
    %15 = tpu.matmul %13, %14, %cst_15 {dimension_numbers = #tpu.dot_dimension_numbers<[1], [0], [0], [1], [0, 0, 1, 1], [], []>} : vector<32x12xf32>, vector<12x16xf32>, vector<32x16xf32> -> vector<32x16xf32>
    %16 = vector.broadcast %1 : vector<1x16xf32> to vector<32x16xf32>
    %17 = arith.addf %15, %16 : vector<32x16xf32>
    %cst_16 = arith.constant 1.000000e+00 : f32
    %18 = vector.broadcast %cst_16 : f32 to vector<1x32xf32>
    %cst_17 = arith.constant dense<0.000000e+00> : vector<1x16xf32>
    %19 = tpu.matmul %18, %17, %cst_17 {dimension_numbers = #tpu.dot_dimension_numbers<[1], [0], [0], [1], [0, 0, 1, 1], [], []>} : vector<1x32xf32>, vector<32x16xf32>, vector<1x16xf32> -> vector<1x16xf32>
    %cst_18 = arith.constant 3.125000e-02 : f32
    %20 = vector.broadcast %cst_18 : f32 to vector<1x16xf32>
    %21 = arith.mulf %19, %20 : vector<1x16xf32>
    %22 = arith.mulf %17, %17 : vector<32x16xf32>
    %cst_19 = arith.constant dense<0.000000e+00> : vector<1x16xf32>
    %23 = tpu.matmul %18, %22, %cst_19 {dimension_numbers = #tpu.dot_dimension_numbers<[1], [0], [0], [1], [0, 0, 1, 1], [], []>} : vector<1x32xf32>, vector<32x16xf32>, vector<1x16xf32> -> vector<1x16xf32>
    %cst_20 = arith.constant 3.125000e-02 : f32
    %24 = vector.broadcast %cst_20 : f32 to vector<1x16xf32>
    %25 = arith.mulf %23, %24 : vector<1x16xf32>
    %26 = arith.mulf %21, %21 : vector<1x16xf32>
    %27 = arith.subf %25, %26 : vector<1x16xf32>
    %cst_21 = arith.constant 0.000000e+00 : f32
    %28 = vector.broadcast %cst_21 : f32 to vector<1x16xf32>
    %29 = arith.maximumf %27, %28 : vector<1x16xf32>
    %cst_22 = arith.constant 9.99999974E-6 : f32
    %30 = vector.broadcast %cst_22 : f32 to vector<1x16xf32>
    %31 = arith.addf %29, %30 : vector<1x16xf32>
    %32 = math.rsqrt %31 : vector<1x16xf32>
    %33 = arith.mulf %32, %2 : vector<1x16xf32>
    %34 = vector.broadcast %21 : vector<1x16xf32> to vector<32x16xf32>
    %35 = arith.subf %17, %34 : vector<32x16xf32>
    %36 = vector.broadcast %33 : vector<1x16xf32> to vector<32x16xf32>
    %37 = arith.mulf %35, %36 : vector<32x16xf32>
    %38 = vector.broadcast %3 : vector<1x16xf32> to vector<32x16xf32>
    %39 = arith.addf %37, %38 : vector<32x16xf32>
    %cst_23 = arith.constant 0.000000e+00 : f32
    %40 = vector.broadcast %cst_23 : f32 to vector<32x16xf32>
    %41 = arith.maximumf %39, %40 : vector<32x16xf32>
    %42 = vector.shape_cast %41 : vector<32x16xf32> to vector<2x16x16xf32>
    %c0_24 = arith.constant 0 : index
    %c0_25 = arith.constant 0 : index
    %43 = vector.load %arg3[%c0_24, %c0_25] : memref<8x16xf32, #tpu.memory_space<vmem>>, vector<8x16xf32>
    %44 = vector.shape_cast %43 : vector<8x16xf32> to vector<1x8x16xf32>
    %45 = vector.broadcast %44 : vector<1x8x16xf32> to vector<2x8x16xf32>
    "tpu.trace_start"() <{level = 10 : i32, message = "brs,bsc->brc"}> : () -> ()
    %cst_26 = arith.constant dense<0.000000e+00> : vector<2x8x16xf32>
    %46 = tpu.matmul %45, %42, %cst_26 {dimension_numbers = #tpu.dot_dimension_numbers<[2], [1], [1], [2], [0, 0, 0, 1, 1, 2], [0], [0]>} : vector<2x8x16xf32>, vector<2x16x16xf32>, vector<2x8x16xf32> -> vector<2x8x16xf32>
    "tpu.trace_stop"() : () -> ()
    %c0_27 = arith.constant 0 : index
    %c0_28 = arith.constant 0 : index
    %47 = vector.load %arg4[%c0_27, %c0_28] : memref<8x16xf32, #tpu.memory_space<vmem>>, vector<8x16xf32>
    %48 = vector.shape_cast %47 : vector<8x16xf32> to vector<1x8x16xf32>
    %49 = vector.broadcast %48 : vector<1x8x16xf32> to vector<2x8x16xf32>
    "tpu.trace_start"() <{level = 10 : i32, message = "brs,bsc->brc"}> : () -> ()
    %cst_29 = arith.constant dense<0.000000e+00> : vector<2x8x16xf32>
    %50 = tpu.matmul %49, %42, %cst_29 {dimension_numbers = #tpu.dot_dimension_numbers<[2], [1], [1], [2], [0, 0, 0, 1, 1, 2], [0], [0]>} : vector<2x8x16xf32>, vector<2x16x16xf32>, vector<2x8x16xf32> -> vector<2x8x16xf32>
    "tpu.trace_stop"() : () -> ()
    %51 = arith.maximumf %46, %50 : vector<2x8x16xf32>
    %c0_30 = arith.constant 0 : index
    %c0_31 = arith.constant 0 : index
    %52 = vector.load %arg12[%c0_30, %c0_31] : memref<1x32xf32, #tpu.memory_space<vmem>>, vector<1x32xf32>
    %c0_32 = arith.constant 0 : index
    %c0_33 = arith.constant 0 : index
    %53 = vector.load %arg13[%c0_32, %c0_33] : memref<1x32xf32, #tpu.memory_space<vmem>>, vector<1x32xf32>
    %c0_34 = arith.constant 0 : index
    %c0_35 = arith.constant 0 : index
    %54 = vector.load %arg14[%c0_34, %c0_35] : memref<1x32xf32, #tpu.memory_space<vmem>>, vector<1x32xf32>
    %c0_36 = arith.constant 0 : index
    %c0_37 = arith.constant 0 : index
    %55 = vector.load %arg5[%c0_36, %c0_37] : memref<8x8xf32, #tpu.memory_space<vmem>>, vector<8x8xf32>
    %56 = vector.shape_cast %55 : vector<8x8xf32> to vector<1x8x8xf32>
    %57 = vector.broadcast %56 : vector<1x8x8xf32> to vector<2x8x8xf32>
    "tpu.trace_start"() <{level = 10 : i32, message = "brs,bsc->brc"}> : () -> ()
    %cst_38 = arith.constant dense<0.000000e+00> : vector<2x8x16xf32>
    %58 = tpu.matmul %57, %51, %cst_38 {dimension_numbers = #tpu.dot_dimension_numbers<[2], [1], [1], [2], [0, 0, 0, 1, 1, 2], [0], [0]>} : vector<2x8x8xf32>, vector<2x8x16xf32>, vector<2x8x16xf32> -> vector<2x8x16xf32>
    "tpu.trace_stop"() : () -> ()
    %c0_39 = arith.constant 0 : index
    %c0_40 = arith.constant 0 : index
    %59 = vector.load %arg6[%c0_39, %c0_40] : memref<8x8xf32, #tpu.memory_space<vmem>>, vector<8x8xf32>
    %60 = vector.shape_cast %59 : vector<8x8xf32> to vector<1x8x8xf32>
    %61 = vector.broadcast %60 : vector<1x8x8xf32> to vector<2x8x8xf32>
    "tpu.trace_start"() <{level = 10 : i32, message = "brs,bsc->brc"}> : () -> ()
    %cst_41 = arith.constant dense<0.000000e+00> : vector<2x8x16xf32>
    %62 = tpu.matmul %61, %51, %cst_41 {dimension_numbers = #tpu.dot_dimension_numbers<[2], [1], [1], [2], [0, 0, 0, 1, 1, 2], [0], [0]>} : vector<2x8x8xf32>, vector<2x8x16xf32>, vector<2x8x16xf32> -> vector<2x8x16xf32>
    "tpu.trace_stop"() : () -> ()
    %63 = tpu.concatenate %58, %51, %62 in 2 : vector<2x8x16xf32>, vector<2x8x16xf32>, vector<2x8x16xf32> -> vector<2x8x48xf32>
    %64 = vector.shape_cast %63 : vector<2x8x48xf32> to vector<16x48xf32>
    %c0_42 = arith.constant 0 : index
    %c0_43 = arith.constant 0 : index
    %65 = vector.load %arg11[%c0_42, %c0_43] : memref<48x32xf32, #tpu.memory_space<vmem>>, vector<48x32xf32>
    %cst_44 = arith.constant dense<0.000000e+00> : vector<16x32xf32>
    %66 = tpu.matmul %64, %65, %cst_44 {dimension_numbers = #tpu.dot_dimension_numbers<[1], [0], [0], [1], [0, 0, 1, 1], [], []>} : vector<16x48xf32>, vector<48x32xf32>, vector<16x32xf32> -> vector<16x32xf32>
    %67 = vector.broadcast %52 : vector<1x32xf32> to vector<16x32xf32>
    %68 = arith.addf %66, %67 : vector<16x32xf32>
    %cst_45 = arith.constant 1.000000e+00 : f32
    %69 = vector.broadcast %cst_45 : f32 to vector<1x16xf32>
    %cst_46 = arith.constant dense<0.000000e+00> : vector<1x32xf32>
    %70 = tpu.matmul %69, %68, %cst_46 {dimension_numbers = #tpu.dot_dimension_numbers<[1], [0], [0], [1], [0, 0, 1, 1], [], []>} : vector<1x16xf32>, vector<16x32xf32>, vector<1x32xf32> -> vector<1x32xf32>
    %cst_47 = arith.constant 6.250000e-02 : f32
    %71 = vector.broadcast %cst_47 : f32 to vector<1x32xf32>
    %72 = arith.mulf %70, %71 : vector<1x32xf32>
    %73 = arith.mulf %68, %68 : vector<16x32xf32>
    %cst_48 = arith.constant dense<0.000000e+00> : vector<1x32xf32>
    %74 = tpu.matmul %69, %73, %cst_48 {dimension_numbers = #tpu.dot_dimension_numbers<[1], [0], [0], [1], [0, 0, 1, 1], [], []>} : vector<1x16xf32>, vector<16x32xf32>, vector<1x32xf32> -> vector<1x32xf32>
    %cst_49 = arith.constant 6.250000e-02 : f32
    %75 = vector.broadcast %cst_49 : f32 to vector<1x32xf32>
    %76 = arith.mulf %74, %75 : vector<1x32xf32>
    %77 = arith.mulf %72, %72 : vector<1x32xf32>
    %78 = arith.subf %76, %77 : vector<1x32xf32>
    %cst_50 = arith.constant 0.000000e+00 : f32
    %79 = vector.broadcast %cst_50 : f32 to vector<1x32xf32>
    %80 = arith.maximumf %78, %79 : vector<1x32xf32>
    %cst_51 = arith.constant 9.99999974E-6 : f32
    %81 = vector.broadcast %cst_51 : f32 to vector<1x32xf32>
    %82 = arith.addf %80, %81 : vector<1x32xf32>
    %83 = math.rsqrt %82 : vector<1x32xf32>
    %84 = arith.mulf %83, %53 : vector<1x32xf32>
    %85 = vector.broadcast %72 : vector<1x32xf32> to vector<16x32xf32>
    %86 = arith.subf %68, %85 : vector<16x32xf32>
    %87 = vector.broadcast %84 : vector<1x32xf32> to vector<16x32xf32>
    %88 = arith.mulf %86, %87 : vector<16x32xf32>
    %89 = vector.broadcast %54 : vector<1x32xf32> to vector<16x32xf32>
    %90 = arith.addf %88, %89 : vector<16x32xf32>
    %cst_52 = arith.constant 0.000000e+00 : f32
    %91 = vector.broadcast %cst_52 : f32 to vector<16x32xf32>
    %92 = arith.maximumf %90, %91 : vector<16x32xf32>
    %93 = vector.shape_cast %92 : vector<16x32xf32> to vector<2x8x32xf32>
    %94 = vector.extract_strided_slice %93 {offsets = [0, 0, 0], sizes = [2, 1, 32], strides = [1, 1, 1]} : vector<2x8x32xf32> to vector<2x1x32xf32>
    %95 = vector.extract_strided_slice %93 {offsets = [0, 1, 0], sizes = [2, 1, 32], strides = [1, 1, 1]} : vector<2x8x32xf32> to vector<2x1x32xf32>
    %96 = vector.extract_strided_slice %93 {offsets = [0, 2, 0], sizes = [2, 1, 32], strides = [1, 1, 1]} : vector<2x8x32xf32> to vector<2x1x32xf32>
    %97 = vector.extract_strided_slice %93 {offsets = [0, 3, 0], sizes = [2, 1, 32], strides = [1, 1, 1]} : vector<2x8x32xf32> to vector<2x1x32xf32>
    %98 = vector.extract_strided_slice %93 {offsets = [0, 4, 0], sizes = [2, 1, 32], strides = [1, 1, 1]} : vector<2x8x32xf32> to vector<2x1x32xf32>
    %99 = vector.extract_strided_slice %93 {offsets = [0, 5, 0], sizes = [2, 1, 32], strides = [1, 1, 1]} : vector<2x8x32xf32> to vector<2x1x32xf32>
    %100 = vector.extract_strided_slice %93 {offsets = [0, 6, 0], sizes = [2, 1, 32], strides = [1, 1, 1]} : vector<2x8x32xf32> to vector<2x1x32xf32>
    %101 = vector.extract_strided_slice %93 {offsets = [0, 7, 0], sizes = [2, 1, 32], strides = [1, 1, 1]} : vector<2x8x32xf32> to vector<2x1x32xf32>
    %102 = tpu.concatenate %94, %95, %96, %97, %98, %99, %100, %101 in 2 : vector<2x1x32xf32>, vector<2x1x32xf32>, vector<2x1x32xf32>, vector<2x1x32xf32>, vector<2x1x32xf32>, vector<2x1x32xf32>, vector<2x1x32xf32>, vector<2x1x32xf32> -> vector<2x1x256xf32>
    %103 = vector.shape_cast %102 : vector<2x1x256xf32> to vector<2x256xf32>
    %c0_53 = arith.constant 0 : index
    %c0_54 = arith.constant 0 : index
    %104 = vector.load %arg15[%c0_53, %c0_54] : memref<256x64xf32, #tpu.memory_space<vmem>>, vector<256x64xf32>
    %cst_55 = arith.constant dense<0.000000e+00> : vector<2x64xf32>
    %105 = tpu.matmul %103, %104, %cst_55 {dimension_numbers = #tpu.dot_dimension_numbers<[1], [0], [0], [1], [0, 0, 1, 1], [], []>} : vector<2x256xf32>, vector<256x64xf32>, vector<2x64xf32> -> vector<2x64xf32>
    %c0_56 = arith.constant 0 : index
    %c0_57 = arith.constant 0 : index
    %106 = vector.load %arg16[%c0_56, %c0_57] : memref<1x64xf32, #tpu.memory_space<vmem>>, vector<1x64xf32>
    %107 = vector.broadcast %106 : vector<1x64xf32> to vector<2x64xf32>
    %108 = arith.addf %105, %107 : vector<2x64xf32>
    %cst_58 = arith.constant 0.000000e+00 : f32
    %109 = vector.broadcast %cst_58 : f32 to vector<2x64xf32>
    %110 = arith.maximumf %108, %109 : vector<2x64xf32>
    %c0_59 = arith.constant 0 : index
    %c0_60 = arith.constant 0 : index
    %111 = vector.load %arg17[%c0_59, %c0_60] : memref<64x3xf32, #tpu.memory_space<vmem>>, vector<64x3xf32>
    %cst_61 = arith.constant dense<0.000000e+00> : vector<2x3xf32>
    %112 = tpu.matmul %110, %111, %cst_61 {dimension_numbers = #tpu.dot_dimension_numbers<[1], [0], [0], [1], [0, 0, 1, 1], [], []>} : vector<2x64xf32>, vector<64x3xf32>, vector<2x3xf32> -> vector<2x3xf32>
    %c0_62 = arith.constant 0 : index
    %c0_63 = arith.constant 0 : index
    %113 = vector.load %arg18[%c0_62, %c0_63] : memref<1x3xf32, #tpu.memory_space<vmem>>, vector<1x3xf32>
    %114 = vector.broadcast %113 : vector<1x3xf32> to vector<2x3xf32>
    %115 = arith.addf %112, %114 : vector<2x3xf32>
    %c0_64 = arith.constant 0 : index
    %c0_65 = arith.constant 0 : index
    %116 = vector.load %arg19[%c0_64, %c0_65] : memref<2x3xf32, #tpu.memory_space<vmem>>, vector<2x3xf32>
    tpu.vector_store %arg19[%c0_64, %c0_65], %115 {strides = array<i32>} : memref<2x3xf32, #tpu.memory_space<vmem>>, vector<2x3xf32>,
    return
  }
}

</mosaic_0001>

<llo_original>
// kernel: tpu_custom_call.1
$region0: #{tpu_custom_call.1}
  #allocation0 [shape = 'u32[]', space=smem, size = 0x4, offset = 0x4, fixed_abs, tag = 'smem constant byte address 0x4 - core index']
  #allocation1 [shape = 'u32[144,128]{1,0:T(1,128)}', space=vmem, size = 0x12000, scoped, tag = 'internal scratch']
  %s0 = inlined_call_operand.vmem [shape: f32[2,16,4], index: 0, kind: input, shape index: {}]
  %s1 = inlined_call_operand.vmem [shape: f32[16,16], index: 1, kind: input, shape index: {}]
  %s2 = inlined_call_operand.vmem [shape: f32[16,16], index: 2, kind: input, shape index: {}]
  %s3 = inlined_call_operand.vmem [shape: f32[8,16], index: 3, kind: input, shape index: {}]
  %s4 = inlined_call_operand.vmem [shape: f32[8,16], index: 4, kind: input, shape index: {}]
  %s5 = inlined_call_operand.vmem [shape: f32[8,8], index: 5, kind: input, shape index: {}]
  %s6 = inlined_call_operand.vmem [shape: f32[8,8], index: 6, kind: input, shape index: {}]
  %s7 = inlined_call_operand.vmem [shape: f32[12,16], index: 7, kind: input, shape index: {}]
  %s8 = inlined_call_operand.vmem [shape: f32[1,16], index: 8, kind: input, shape index: {}]
  %s9 = inlined_call_operand.vmem [shape: f32[1,16], index: 9, kind: input, shape index: {}]
  %s10 = inlined_call_operand.vmem [shape: f32[1,16], index: 10, kind: input, shape index: {}]
  %s11 = inlined_call_operand.vmem [shape: f32[48,32], index: 11, kind: input, shape index: {}]
  %s12 = inlined_call_operand.vmem [shape: f32[1,32], index: 12, kind: input, shape index: {}]
  %s13 = inlined_call_operand.vmem [shape: f32[1,32], index: 13, kind: input, shape index: {}]
  %s14 = inlined_call_operand.vmem [shape: f32[1,32], index: 14, kind: input, shape index: {}]
  %s15 = inlined_call_operand.vmem [shape: f32[256,64], index: 15, kind: input, shape index: {}]
  %s16 = inlined_call_operand.vmem [shape: f32[1,64], index: 16, kind: input, shape index: {}]
  %s17 = inlined_call_operand.vmem [shape: f32[64,3], index: 17, kind: input, shape index: {}]
  %s18 = inlined_call_operand.vmem [shape: f32[1,3], index: 18, kind: input, shape index: {}]
  %s19 = inlined_call_operand.hbm [shape: f32[2,3], index: 19, kind: output, shape index: {}]
  %s20 = sld [smem:[#allocation0]]
  $region86: #{tpu_custom_call.1} parent=0
    _
  %s22 = ssub.s32 1, %s20
  %s23 = scalar_select 0, %s22, %s20
  $region1: #{tpu_custom_call.1} parent=0
    #allocation2 [shape = 'u8[1024]{0}', space=vmem, size = 0x400, scoped, tag = 'output window, operand 0, single buffered']
    #allocation3 [shape = 's32[1]{0}', space=sflag, size = 0x4, scoped, tag = 'scoped memory for tpu_custom_call.1']
    %24 = vsyncpa [#allocation3], 0
    // Predicated region
    $region2: #{tpu_custom_call.1} parent=1 // pred_check
      _
    $region3: #{tpu_custom_call.1} parent=1 // pred_check_branch
      %26 = sbr.rel (0) target = $region5
    $region4: #{tpu_custom_call.1} parent=1 // pred_region
      _
    $region5: #{tpu_custom_call.1} parent=1 // pred_fallthru
      _
    // Predicated region
    $region6: #{tpu_custom_call.1} parent=1 // pred_check
      _
    $region7: #{tpu_custom_call.1} parent=1 // pred_check_branch
      %28 = sbr.rel (0) target = $region9
    $region8: #{tpu_custom_call.1} parent=1 // pred_region
      _
    $region9: #{tpu_custom_call.1} parent=1 // pred_fallthru
      _
    // Predicated region
    $region10: #{tpu_custom_call.1} parent=1 // pred_check
      _
    $region11: #{tpu_custom_call.1} parent=1 // pred_check_branch
      %30 = sbr.rel (0) target = $region13
    $region12: #{tpu_custom_call.1} parent=1 // pred_region
      _
    $region13: #{tpu_custom_call.1} parent=1 // pred_fallthru
      _
    // Predicated region
    $region14: #{tpu_custom_call.1} parent=1 // pred_check
      _
    $region15: #{tpu_custom_call.1} parent=1 // pred_check_branch
      %32 = sbr.rel (0) target = $region17
    $region16: #{tpu_custom_call.1} parent=1 // pred_region
      _
    $region17: #{tpu_custom_call.1} parent=1 // pred_fallthru
      _
    // Predicated region
    $region18: #{tpu_custom_call.1} parent=1 // pred_check
      _
    $region19: #{tpu_custom_call.1} parent=1 // pred_check_branch
      %34 = sbr.rel (0) target = $region21
    $region20: #{tpu_custom_call.1} parent=1 // pred_region
      _
    $region21: #{tpu_custom_call.1} parent=1 // pred_fallthru
      _
    // Predicated region
    $region22: #{tpu_custom_call.1} parent=1 // pred_check
      _
    $region23: #{tpu_custom_call.1} parent=1 // pred_check_branch
      %36 = sbr.rel (0) target = $region25
    $region24: #{tpu_custom_call.1} parent=1 // pred_region
      _
    $region25: #{tpu_custom_call.1} parent=1 // pred_fallthru
      _
    // Predicated region
    $region26: #{tpu_custom_call.1} parent=1 // pred_check
      _
    $region27: #{tpu_custom_call.1} parent=1 // pred_check_branch
      %38 = sbr.rel (0) target = $region29
    $region28: #{tpu_custom_call.1} parent=1 // pred_region
      _
    $region29: #{tpu_custom_call.1} parent=1 // pred_fallthru
      _
    // Predicated region
    $region30: #{tpu_custom_call.1} parent=1 // pred_check
      _
    $region31: #{tpu_custom_call.1} parent=1 // pred_check_branch
      %40 = sbr.rel (0) target = $region33
    $region32: #{tpu_custom_call.1} parent=1 // pred_region
      _
    $region33: #{tpu_custom_call.1} parent=1 // pred_fallthru
      _
    // Predicated region
    $region34: #{tpu_custom_call.1} parent=1 // pred_check
      _
    $region35: #{tpu_custom_call.1} parent=1 // pred_check_branch
      %42 = sbr.rel (0) target = $region37
    $region36: #{tpu_custom_call.1} parent=1 // pred_region
      _
    $region37: #{tpu_custom_call.1} parent=1 // pred_fallthru
      _
    // Predicated region
    $region38: #{tpu_custom_call.1} parent=1 // pred_check
      _
    $region39: #{tpu_custom_call.1} parent=1 // pred_check_branch
      %44 = sbr.rel (0) target = $region41
    $region40: #{tpu_custom_call.1} parent=1 // pred_region
      _
    $region41: #{tpu_custom_call.1} parent=1 // pred_fallthru
      _
    // Predicated region
    $region42: #{tpu_custom_call.1} parent=1 // pred_check
      _
    $region43: #{tpu_custom_call.1} parent=1 // pred_check_branch
      %46 = sbr.rel (0) target = $region45
    $region44: #{tpu_custom_call.1} parent=1 // pred_region
      _
    $region45: #{tpu_custom_call.1} parent=1 // pred_fallthru
      _
    // Predicated region
    $region46: #{tpu_custom_call.1} parent=1 // pred_check
      _
    $region47: #{tpu_custom_call.1} parent=1 // pred_check_branch
      %48 = sbr.rel (0) target = $region49
    $region48: #{tpu_custom_call.1} parent=1 // pred_region
      _
    $region49: #{tpu_custom_call.1} parent=1 // pred_fallthru
      _
    // Predicated region
    $region50: #{tpu_custom_call.1} parent=1 // pred_check
      _
    $region51: #{tpu_custom_call.1} parent=1 // pred_check_branch
      %50 = sbr.rel (0) target = $region53
    $region52: #{tpu_custom_call.1} parent=1 // pred_region
      _
    $region53: #{tpu_custom_call.1} parent=1 // pred_fallthru
      _
    // Predicated region
    $region54: #{tpu_custom_call.1} parent=1 // pred_check
      _
    $region55: #{tpu_custom_call.1} parent=1 // pred_check_branch
      %52 = sbr.rel (0) target = $region57
    $region56: #{tpu_custom_call.1} parent=1 // pred_region
      _
    $region57: #{tpu_custom_call.1} parent=1 // pred_fallthru
      _
    // Predicated region
    $region58: #{tpu_custom_call.1} parent=1 // pred_check
      _
    $region59: #{tpu_custom_call.1} parent=1 // pred_check_branch
      %54 = sbr.rel (0) target = $region61
    $region60: #{tpu_custom_call.1} parent=1 // pred_region
      _
    $region61: #{tpu_custom_call.1} parent=1 // pred_fallthru
      _
    // Predicated region
    $region62: #{tpu_custom_call.1} parent=1 // pred_check
      _
    $region63: #{tpu_custom_call.1} parent=1 // pred_check_branch
      %56 = sbr.rel (0) target = $region65
    $region64: #{tpu_custom_call.1} parent=1 // pred_region
      _
    $region65: #{tpu_custom_call.1} parent=1 // pred_fallthru
      _
    // Predicated region
    $region66: #{tpu_custom_call.1} parent=1 // pred_check
      _
    $region67: #{tpu_custom_call.1} parent=1 // pred_check_branch
      %58 = sbr.rel (0) target = $region69
    $region68: #{tpu_custom_call.1} parent=1 // pred_region
      _
    $region69: #{tpu_custom_call.1} parent=1 // pred_fallthru
      _
    // Predicated region
    $region70: #{tpu_custom_call.1} parent=1 // pred_check
      _
    $region71: #{tpu_custom_call.1} parent=1 // pred_check_branch
      %60 = sbr.rel (0) target = $region73
    $region72: #{tpu_custom_call.1} parent=1 // pred_region
      _
    $region73: #{tpu_custom_call.1} parent=1 // pred_fallthru
      _
    // Predicated region
    $region74: #{tpu_custom_call.1} parent=1 // pred_check
      _
    $region75: #{tpu_custom_call.1} parent=1 // pred_check_branch
      %62 = sbr.rel (0) target = $region77
    $region76: #{tpu_custom_call.1} parent=1 // pred_region
      _
    $region77: #{tpu_custom_call.1} parent=1 // pred_fallthru
      _
    %v63 = vld [vmem:[%s0] sm:$0xff]
    %v64 = vld [vmem:[%s0 + $0x8] sm:$0xff]
    %v65 = vld [vmem:[%s0 + $0x10] sm:$0xff]
    %v66 = vld [vmem:[%s0 + $0x18] sm:$0xff]
    %v67 = vld [vmem:[%s8] sm:$0x1]
    %v68 = vld [vmem:[%s9] sm:$0x1]
    %v69 = vld [vmem:[%s10] sm:$0x1]
    %v70 = vld [vmem:[%s1] sm:$0xff]
    %v71 = vld [vmem:[%s1 + $0x8] sm:$0xff]
    %vm72 = vcmask 130048
    %v74 = vsel %vm72, %v70, 0
    %v77 = vsel %vm72, %v71, 0
    %79 = vmatprep.subr.mxu0 0.0
    %80 = vmatpush1.msra.mxu0 %v63
    %81 = vmatprep.subr.mxu0 0.0
    %82 = vmatpush1.msra.mxu0 %v64
    %83 = vmatprep.subr.mxu0 0.0
    %84 = vmatpush1.msra.mxu0 0.0
    %85 = vmatprep.subr.mxu0 0.0
    %86 = vmatpush1.msra.mxu0 0.0
    %87 = vmatprep.subr.mxu0 0.0
    %88 = vmatpush1.msra.mxu0 0.0
    %89 = vmatprep.subr.mxu0 0.0
    %90 = vmatpush1.msra.mxu0 0.0
    %91 = vmatprep.subr.mxu0 0.0
    %92 = vmatpush1.msra.mxu0 0.0
    %93 = vmatprep.subr.mxu0 0.0
    %94 = vmatpush1.msra.mxu0 0.0
    %95 = vmatprep.subr.mxu0 0.0
    %96 = vmatpush1.msra.mxu0 0.0
    %97 = vmatprep.subr.mxu0 0.0
    %98 = vmatpush1.msra.mxu0 0.0
    %99 = vmatprep.subr.mxu0 0.0
    %100 = vmatpush1.msra.mxu0 0.0
    %101 = vmatprep.subr.mxu0 0.0
    %102 = vmatpush1.msra.mxu0 0.0
    %103 = vmatprep.subr.mxu0 0.0
    %104 = vmatpush1.msra.mxu0 0.0
    %105 = vmatprep.subr.mxu0 0.0
    %106 = vmatpush1.msra.mxu0 0.0
    %107 = vmatprep.subr.mxu0 0.0
    %108 = vmatpush1.msra.mxu0 0.0
    %109 = vmatprep.subr.mxu0 0.0
    %110 = vmatpush1.msra.mxu0 0.0
    %111 = vmatprep.subr.mxu0 0.0
    %112 = vmatpush1.msra.mxu0 0.0
    %113 = vmatprep.subr.mxu0 0.0
    %114 = vmatpush1.msra.mxu0 0.0
    %115 = vmatprep.subr.mxu0 0.0
    %116 = vmatpush1.msra.mxu0 0.0
    %117 = vmatprep.subr.mxu0 0.0
    %118 = vmatpush1.msra.mxu0 0.0
    %119 = vmatprep.subr.mxu0 0.0
    %120 = vmatpush1.msra.mxu0 0.0
    %121 = vmatprep.subr.mxu0 0.0
    %122 = vmatpush1.msra.mxu0 0.0
    %123 = vmatprep.subr.mxu0 0.0
    %124 = vmatpush1.msra.mxu0 0.0
    %125 = vmatprep.subr.mxu0 0.0
    %126 = vmatpush1.msra.mxu0 0.0
    %127 = vmatprep.subr.mxu0 0.0
    %128 = vmatpush1.msra.mxu0 0.0
    %129 = vmatprep.subr.mxu0 0.0
    %130 = vmatpush1.msra.mxu0 0.0
    %131 = vmatprep.subr.mxu0 0.0
    %132 = vmatpush1.msra.mxu0 0.0
    %133 = vmatprep.subr.mxu0 0.0
    %134 = vmatpush1.msra.mxu0 0.0
    %135 = vmatprep.subr.mxu0 0.0
    %136 = vmatpush1.msra.mxu0 0.0
    %137 = vmatprep.subr.mxu0 0.0
    %138 = vmatpush1.msra.mxu0 0.0
    %139 = vmatprep.subr.mxu0 0.0
    %140 = vmatpush1.msra.mxu0 0.0
    %141 = vmatprep.subr.mxu0 0.0
    %142 = vmatpush1.msra.mxu0 0.0
    %143 = vmatprep.mubr.f32.mxu0 0.0
    %144 = vmatmul.mubr.f32.gmra.mrb[0].mxu0 %v74
    %v145 = vpop.f32.mrb[0].mxu0
    %v146 = vadd.f32 0.0, %v145
    %v147 = vpop.f32.mrb[0].mxu0
    %148 = vmatprep.mubr.f32.mxu0 0.0
    %149 = vmatmul.mubr.f32.gmra.mrb[0].mxu0 %v77
    %v150 = vpop.f32.mrb[0].mxu0
    %v151 = vadd.f32 0.0, %v150
    %v152 = vpop.f32.mrb[0].mxu0
    %153 = vdwg.mxu0
    %154 = vmatprep.subr.mxu0 0.0
    %155 = vmatpush1.msra.mxu0 %v65
    %156 = vmatprep.subr.mxu0 0.0
    %157 = vmatpush1.msra.mxu0 %v66
    %158 = vmatprep.subr.mxu0 0.0
    %159 = vmatpush1.msra.mxu0 0.0
    %160 = vmatprep.subr.mxu0 0.0
    %161 = vmatpush1.msra.mxu0 0.0
    %162 = vmatprep.subr.mxu0 0.0
    %163 = vmatpush1.msra.mxu0 0.0
    %164 = vmatprep.subr.mxu0 0.0
    %165 = vmatpush1.msra.mxu0 0.0
    %166 = vmatprep.subr.mxu0 0.0
    %167 = vmatpush1.msra.mxu0 0.0
    %168 = vmatprep.subr.mxu0 0.0
    %169 = vmatpush1.msra.mxu0 0.0
    %170 = vmatprep.subr.mxu0 0.0
    %171 = vmatpush1.msra.mxu0 0.0
    %172 = vmatprep.subr.mxu0 0.0
    %173 = vmatpush1.msra.mxu0 0.0
    %174 = vmatprep.subr.mxu0 0.0
    %175 = vmatpush1.msra.mxu0 0.0
    %176 = vmatprep.subr.mxu0 0.0
    %177 = vmatpush1.msra.mxu0 0.0
    %178 = vmatprep.subr.mxu0 0.0
    %179 = vmatpush1.msra.mxu0 0.0
    %180 = vmatprep.subr.mxu0 0.0
    %181 = vmatpush1.msra.mxu0 0.0
    %182 = vmatprep.subr.mxu0 0.0
    %183 = vmatpush1.msra.mxu0 0.0
    %184 = vmatprep.subr.mxu0 0.0
    %185 = vmatpush1.msra.mxu0 0.0
    %186 = vmatprep.subr.mxu0 0.0
    %187 = vmatpush1.msra.mxu0 0.0
    %188 = vmatprep.subr.mxu0 0.0
    %189 = vmatpush1.msra.mxu0 0.0
    %190 = vmatprep.subr.mxu0 0.0
    %191 = vmatpush1.msra.mxu0 0.0
    %192 = vmatprep.subr.mxu0 0.0
    %193 = vmatpush1.msra.mxu0 0.0
    %194 = vmatprep.subr.mxu0 0.0
    %195 = vmatpush1.msra.mxu0 0.0
    %196 = vmatprep.subr.mxu0 0.0
    %197 = vmatpush1.msra.mxu0 0.0
    %198 = vmatprep.subr.mxu0 0.0
    %199 = vmatpush1.msra.mxu0 0.0
    %200 = vmatprep.subr.mxu0 0.0
    %201 = vmatpush1.msra.mxu0 0.0
    %202 = vmatprep.subr.mxu0 0.0
    %203 = vmatpush1.msra.mxu0 0.0
    %204 = vmatprep.subr.mxu0 0.0
    %205 = vmatpush1.msra.mxu0 0.0
    %206 = vmatprep.subr.mxu0 0.0
    %207 = vmatpush1.msra.mxu0 0.0
    %208 = vmatprep.subr.mxu0 0.0
    %209 = vmatpush1.msra.mxu0 0.0
    %210 = vmatprep.subr.mxu0 0.0
    %211 = vmatpush1.msra.mxu0 0.0
    %212 = vmatprep.subr.mxu0 0.0
    %213 = vmatpush1.msra.mxu0 0.0
    %214 = vmatprep.subr.mxu0 0.0
    %215 = vmatpush1.msra.mxu0 0.0
    %216 = vmatprep.subr.mxu0 0.0
    %217 = vmatpush1.msra.mxu0 0.0
    %218 = vmatprep.mubr.f32.mxu0 0.0
    %219 = vmatmul.mubr.f32.gmra.mrb[0].mxu0 %v74
    %v220 = vpop.f32.mrb[0].mxu0
    %v221 = vadd.f32 0.0, %v220
    %v222 = vpop.f32.mrb[0].mxu0
    %223 = vmatprep.mubr.f32.mxu0 0.0
    %224 = vmatmul.mubr.f32.gmra.mrb[0].mxu0 %v77
    %v225 = vpop.f32.mrb[0].mxu0
    %v226 = vadd.f32 0.0, %v225
    %v227 = vpop.f32.mrb[0].mxu0
    %228 = vdwg.mxu0
    %v229 = vld [vmem:[%s2] sm:$0xff]
    %v230 = vld [vmem:[%s2 + $0x8] sm:$0xff]
    %v232 = vsel %vm72, %v229, 0
    %v235 = vsel %vm72, %v230, 0
    %237 = vmatprep.subr.mxu0 0.0
    %238 = vmatpush1.msra.mxu0 %v63
    %239 = vmatprep.subr.mxu0 0.0
    %240 = vmatpush1.msra.mxu0 %v64
    %241 = vmatprep.subr.mxu0 0.0
    %242 = vmatpush1.msra.mxu0 0.0
    %243 = vmatprep.subr.mxu0 0.0
    %244 = vmatpush1.msra.mxu0 0.0
    %245 = vmatprep.subr.mxu0 0.0
    %246 = vmatpush1.msra.mxu0 0.0
    %247 = vmatprep.subr.mxu0 0.0
    %248 = vmatpush1.msra.mxu0 0.0
    %249 = vmatprep.subr.mxu0 0.0
    %250 = vmatpush1.msra.mxu0 0.0
    %251 = vmatprep.subr.mxu0 0.0
    %252 = vmatpush1.msra.mxu0 0.0
    %253 = vmatprep.subr.mxu0 0.0
    %254 = vmatpush1.msra.mxu0 0.0
    %255 = vmatprep.subr.mxu0 0.0
    %256 = vmatpush1.msra.mxu0 0.0
    %257 = vmatprep.subr.mxu0 0.0
    %258 = vmatpush1.msra.mxu0 0.0
    %259 = vmatprep.subr.mxu0 0.0
    %260 = vmatpush1.msra.mxu0 0.0
    %261 = vmatprep.subr.mxu0 0.0
    %262 = vmatpush1.msra.mxu0 0.0
    %263 = vmatprep.subr.mxu0 0.0
    %264 = vmatpush1.msra.mxu0 0.0
    %265 = vmatprep.subr.mxu0 0.0
    %266 = vmatpush1.msra.mxu0 0.0
    %267 = vmatprep.subr.mxu0 0.0
    %268 = vmatpush1.msra.mxu0 0.0
    %269 = vmatprep.subr.mxu0 0.0
    %270 = vmatpush1.msra.mxu0 0.0
    %271 = vmatprep.subr.mxu0 0.0
    %272 = vmatpush1.msra.mxu0 0.0
    %273 = vmatprep.subr.mxu0 0.0
    %274 = vmatpush1.msra.mxu0 0.0
    %275 = vmatprep.subr.mxu0 0.0
    %276 = vmatpush1.msra.mxu0 0.0
    %277 = vmatprep.subr.mxu0 0.0
    %278 = vmatpush1.msra.mxu0 0.0
    %279 = vmatprep.subr.mxu0 0.0
    %280 = vmatpush1.msra.mxu0 0.0
    %281 = vmatprep.subr.mxu0 0.0
    %282 = vmatpush1.msra.mxu0 0.0
    %283 = vmatprep.subr.mxu0 0.0
    %284 = vmatpush1.msra.mxu0 0.0
    %285 = vmatprep.subr.mxu0 0.0
    %286 = vmatpush1.msra.mxu0 0.0
    %287 = vmatprep.subr.mxu0 0.0
    %288 = vmatpush1.msra.mxu0 0.0
    %289 = vmatprep.subr.mxu0 0.0
    %290 = vmatpush1.msra.mxu0 0.0
    %291 = vmatprep.subr.mxu0 0.0
    %292 = vmatpush1.msra.mxu0 0.0
    %293 = vmatprep.subr.mxu0 0.0
    %294 = vmatpush1.msra.mxu0 0.0
    %295 = vmatprep.subr.mxu0 0.0
    %296 = vmatpush1.msra.mxu0 0.0
    %297 = vmatprep.subr.mxu0 0.0
    %298 = vmatpush1.msra.mxu0 0.0
    %299 = vmatprep.subr.mxu0 0.0
    %300 = vmatpush1.msra.mxu0 0.0
    %301 = vmatprep.mubr.f32.mxu0 0.0
    %302 = vmatmul.mubr.f32.gmra.mrb[0].mxu0 %v232
    %v303 = vpop.f32.mrb[0].mxu0
    %v304 = vadd.f32 0.0, %v303
    %v305 = vpop.f32.mrb[0].mxu0
    %306 = vmatprep.mubr.f32.mxu0 0.0
    %307 = vmatmul.mubr.f32.gmra.mrb[0].mxu0 %v235
    %v308 = vpop.f32.mrb[0].mxu0
    %v309 = vadd.f32 0.0, %v308
    %v310 = vpop.f32.mrb[0].mxu0
    %311 = vdwg.mxu0
    %312 = vmatprep.subr.mxu0 0.0
    %313 = vmatpush1.msra.mxu0 %v65
    %314 = vmatprep.subr.mxu0 0.0
    %315 = vmatpush1.msra.mxu0 %v66
    %316 = vmatprep.subr.mxu0 0.0
    %317 = vmatpush1.msra.mxu0 0.0
    %318 = vmatprep.subr.mxu0 0.0
    %319 = vmatpush1.msra.mxu0 0.0
    %320 = vmatprep.subr.mxu0 0.0
    %321 = vmatpush1.msra.mxu0 0.0
    %322 = vmatprep.subr.mxu0 0.0
    %323 = vmatpush1.msra.mxu0 0.0
    %324 = vmatprep.subr.mxu0 0.0
    %325 = vmatpush1.msra.mxu0 0.0
    %326 = vmatprep.subr.mxu0 0.0
    %327 = vmatpush1.msra.mxu0 0.0
    %328 = vmatprep.subr.mxu0 0.0
    %329 = vmatpush1.msra.mxu0 0.0
    %330 = vmatprep.subr.mxu0 0.0
    %331 = vmatpush1.msra.mxu0 0.0
    %332 = vmatprep.subr.mxu0 0.0
    %333 = vmatpush1.msra.mxu0 0.0
    %334 = vmatprep.subr.mxu0 0.0
    %335 = vmatpush1.msra.mxu0 0.0
    %336 = vmatprep.subr.mxu0 0.0
    %337 = vmatpush1.msra.mxu0 0.0
    %338 = vmatprep.subr.mxu0 0.0
    %339 = vmatpush1.msra.mxu0 0.0
    %340 = vmatprep.subr.mxu0 0.0
    %341 = vmatpush1.msra.mxu0 0.0
    %342 = vmatprep.subr.mxu0 0.0
    %343 = vmatpush1.msra.mxu0 0.0
    %344 = vmatprep.subr.mxu0 0.0
    %345 = vmatpush1.msra.mxu0 0.0
    %346 = vmatprep.subr.mxu0 0.0
    %347 = vmatpush1.msra.mxu0 0.0
    %348 = vmatprep.subr.mxu0 0.0
    %349 = vmatpush1.msra.mxu0 0.0
    %350 = vmatprep.subr.mxu0 0.0
    %351 = vmatpush1.msra.mxu0 0.0
    %352 = vmatprep.subr.mxu0 0.0
    %353 = vmatpush1.msra.mxu0 0.0
    %354 = vmatprep.subr.mxu0 0.0
    %355 = vmatpush1.msra.mxu0 0.0
    %356 = vmatprep.subr.mxu0 0.0
    %357 = vmatpush1.msra.mxu0 0.0
    %358 = vmatprep.subr.mxu0 0.0
    %359 = vmatpush1.msra.mxu0 0.0
    %360 = vmatprep.subr.mxu0 0.0
    %361 = vmatpush1.msra.mxu0 0.0
    %362 = vmatprep.subr.mxu0 0.0
    %363 = vmatpush1.msra.mxu0 0.0
    %364 = vmatprep.subr.mxu0 0.0
    %365 = vmatpush1.msra.mxu0 0.0
    %366 = vmatprep.subr.mxu0 0.0
    %367 = vmatpush1.msra.mxu0 0.0
    %368 = vmatprep.subr.mxu0 0.0
    %369 = vmatpush1.msra.mxu0 0.0
    %370 = vmatprep.subr.mxu0 0.0
    %371 = vmatpush1.msra.mxu0 0.0
    %372 = vmatprep.subr.mxu0 0.0
    %373 = vmatpush1.msra.mxu0 0.0
    %374 = vmatprep.subr.mxu0 0.0
    %375 = vmatpush1.msra.mxu0 0.0
    %376 = vmatprep.mubr.f32.mxu0 0.0
    %377 = vmatmul.mubr.f32.gmra.mrb[0].mxu0 %v232
    %v378 = vpop.f32.mrb[0].mxu0
    %v379 = vadd.f32 0.0, %v378
    %v380 = vpop.f32.mrb[0].mxu0
    %381 = vmatprep.mubr.f32.mxu0 0.0
    %382 = vmatmul.mubr.f32.gmra.mrb[0].mxu0 %v235
    %v383 = vpop.f32.mrb[0].mxu0
    %v384 = vadd.f32 0.0, %v383
    %v385 = vpop.f32.mrb[0].mxu0
    %386 = vdwg.mxu0
    %391 = vrot.lane.b32.xlu0 %v63, 4
    %v392 = vpop.permute.xlu0 %391
    %393 = vrot.lane.b32.xlu0 %v64, 4
    %v394 = vpop.permute.xlu0 %393
    %395 = vrot.lane.b32.xlu0 %v65, 4
    %v396 = vpop.permute.xlu0 %395
    %397 = vrot.lane.b32.xlu0 %v66, 4
    %v398 = vpop.permute.xlu0 %397
    %407 = vrot.lane.b32.xlu0 %v304, 8
    %v408 = vpop.permute.xlu0 %407
    %409 = vrot.lane.b32.xlu0 %v309, 8
    %v410 = vpop.permute.xlu0 %409
    %411 = vrot.lane.b32.xlu0 %v379, 8
    %v412 = vpop.permute.xlu0 %411
    %413 = vrot.lane.b32.xlu0 %v384, 8
    %v414 = vpop.permute.xlu0 %413
    %vm419 = vcmask 31744
    %v420 = vsel %vm419, %v146, %v392
    %v421 = vsel %vm419, %v151, %v394
    %v422 = vsel %vm419, %v221, %v396
    %v423 = vsel %vm419, %v226, %v398
    %vm424 = vcmask 64512
    %v425 = vsel %vm424, %v420, %v408
    %v426 = vsel %vm424, %v421, %v410
    %v427 = vsel %vm424, %v422, %v412
    %v428 = vsel %vm424, %v423, %v414
    %v429 = vld [vmem:[%s7] sm:$0xff]
    %v430 = vld [vmem:[%s7 + $0x8] sm:$0xf]
    %v432 = vlaneseq
    %v433 = vshrl.u32 %v432, 7
    %v434 = vsub.s32 0, %v433
    %v435 = vrot.slane %v67, %v434
    %vm437 = vcmask 97280
    %v439 = vsel %vm437, %v425, 0
    %v442 = vsel %vm437, %v426, 0
    %v445 = vsel %vm437, %v427, 0
    %v448 = vsel %vm437, %v428, 0
    %vm450 = vcmask 1043456
    %v452 = vsel %vm450, %v430, 0
    %454 = vmatprep.subr.mxu0 0.0
    %455 = vmatpush1.msra.mxu0 %v429
    %456 = vmatprep.subr.mxu0 0.0
    %457 = vmatpush1.msra.mxu0 %v452
    %458 = vmatprep.subr.mxu0 0.0
    %459 = vmatpush1.msra.mxu0 0.0
    %460 = vmatprep.subr.mxu0 0.0
    %461 = vmatpush1.msra.mxu0 0.0
    %462 = vmatprep.subr.mxu0 0.0
    %463 = vmatpush1.msra.mxu0 0.0
    %464 = vmatprep.subr.mxu0 0.0
    %465 = vmatpush1.msra.mxu0 0.0
    %466 = vmatprep.subr.mxu0 0.0
    %467 = vmatpush1.msra.mxu0 0.0
    %468 = vmatprep.subr.mxu0 0.0
    %469 = vmatpush1.msra.mxu0 0.0
    %470 = vmatprep.subr.mxu0 0.0
    %471 = vmatpush1.msra.mxu0 0.0
    %472 = vmatprep.subr.mxu0 0.0
    %473 = vmatpush1.msra.mxu0 0.0
    %474 = vmatprep.subr.mxu0 0.0
    %475 = vmatpush1.msra.mxu0 0.0
    %476 = vmatprep.subr.mxu0 0.0
    %477 = vmatpush1.msra.mxu0 0.0
    %478 = vmatprep.subr.mxu0 0.0
    %479 = vmatpush1.msra.mxu0 0.0
    %480 = vmatprep.subr.mxu0 0.0
    %481 = vmatpush1.msra.mxu0 0.0
    %482 = vmatprep.subr.mxu0 0.0
    %483 = vmatpush1.msra.mxu0 0.0
    %484 = vmatprep.subr.mxu0 0.0
    %485 = vmatpush1.msra.mxu0 0.0
    %486 = vmatprep.subr.mxu0 0.0
    %487 = vmatpush1.msra.mxu0 0.0
    %488 = vmatprep.subr.mxu0 0.0
    %489 = vmatpush1.msra.mxu0 0.0
    %490 = vmatprep.subr.mxu0 0.0
    %491 = vmatpush1.msra.mxu0 0.0
    %492 = vmatprep.subr.mxu0 0.0
    %493 = vmatpush1.msra.mxu0 0.0
    %494 = vmatprep.subr.mxu0 0.0
    %495 = vmatpush1.msra.mxu0 0.0
    %496 = vmatprep.subr.mxu0 0.0
    %497 = vmatpush1.msra.mxu0 0.0
    %498 = vmatprep.subr.mxu0 0.0
    %499 = vmatpush1.msra.mxu0 0.0
    %500 = vmatprep.subr.mxu0 0.0
    %501 = vmatpush1.msra.mxu0 0.0
    %502 = vmatprep.subr.mxu0 0.0
    %503 = vmatpush1.msra.mxu0 0.0
    %504 = vmatprep.subr.mxu0 0.0
    %505 = vmatpush1.msra.mxu0 0.0
    %506 = vmatprep.subr.mxu0 0.0
    %507 = vmatpush1.msra.mxu0 0.0
    %508 = vmatprep.subr.mxu0 0.0
    %509 = vmatpush1.msra.mxu0 0.0
    %510 = vmatprep.subr.mxu0 0.0
    %511 = vmatpush1.msra.mxu0 0.0
    %512 = vmatprep.subr.mxu0 0.0
    %513 = vmatpush1.msra.mxu0 0.0
    %514 = vmatprep.subr.mxu0 0.0
    %515 = vmatpush1.msra.mxu0 0.0
    %516 = vmatprep.subr.mxu0 0.0
    %517 = vmatpush1.msra.mxu0 0.0
    %518 = vmatprep.mubr.f32.mxu0 0.0
    %519 = vmatmul.mubr.f32.gmra.mrb[0].mxu0 %v439
    %v520 = vpop.f32.mrb[0].mxu0
    %v521 = vadd.f32 %v435, %v520
    %v522 = vpop.f32.mrb[0].mxu0
    %523 = vmatprep.mubr.f32.mxu0 0.0
    %524 = vmatmul.mubr.f32.gmra.mrb[0].mxu0 %v442
    %v525 = vpop.f32.mrb[0].mxu0
    %v526 = vadd.f32 %v435, %v525
    %v527 = vpop.f32.mrb[0].mxu0
    %528 = vmatprep.mubr.f32.mxu0 0.0
    %529 = vmatmul.mubr.f32.gmra.mrb[0].mxu0 %v445
    %v530 = vpop.f32.mrb[0].mxu0
    %v531 = vadd.f32 %v435, %v530
    %v532 = vpop.f32.mrb[0].mxu0
    %533 = vmatprep.mubr.f32.mxu0 0.0
    %534 = vmatmul.mubr.f32.gmra.mrb[0].mxu0 %v448
    %v535 = vpop.f32.mrb[0].mxu0
    %v536 = vadd.f32 %v435, %v535
    %v537 = vpop.f32.mrb[0].mxu0
    %538 = vdwg.mxu0
    %vm539 = vcmask 261120
    %v541 = vsel %vm539, 1.0, 0
    %543 = vmatprep.subr.mxu0 0.0
    %544 = vmatpush1.msra.mxu0 %v521
    %545 = vmatprep.subr.mxu0 0.0
    %546 = vmatpush1.msra.mxu0 %v526
    %547 = vmatprep.subr.mxu0 0.0
    %548 = vmatpush1.msra.mxu0 %v531
    %549 = vmatprep.subr.mxu0 0.0
    %550 = vmatpush1.msra.mxu0 %v536
    %551 = vmatprep.subr.mxu0 0.0
    %552 = vmatpush1.msra.mxu0 0.0
    %553 = vmatprep.subr.mxu0 0.0
    %554 = vmatpush1.msra.mxu0 0.0
    %555 = vmatprep.subr.mxu0 0.0
    %556 = vmatpush1.msra.mxu0 0.0
    %557 = vmatprep.subr.mxu0 0.0
    %558 = vmatpush1.msra.mxu0 0.0
    %559 = vmatprep.subr.mxu0 0.0
    %560 = vmatpush1.msra.mxu0 0.0
    %561 = vmatprep.subr.mxu0 0.0
    %562 = vmatpush1.msra.mxu0 0.0
    %563 = vmatprep.subr.mxu0 0.0
    %564 = vmatpush1.msra.mxu0 0.0
    %565 = vmatprep.subr.mxu0 0.0
    %566 = vmatpush1.msra.mxu0 0.0
    %567 = vmatprep.subr.mxu0 0.0
    %568 = vmatpush1.msra.mxu0 0.0
    %569 = vmatprep.subr.mxu0 0.0
    %570 = vmatpush1.msra.mxu0 0.0
    %571 = vmatprep.subr.mxu0 0.0
    %572 = vmatpush1.msra.mxu0 0.0
    %573 = vmatprep.subr.mxu0 0.0
    %574 = vmatpush1.msra.mxu0 0.0
    %575 = vmatprep.subr.mxu0 0.0
    %576 = vmatpush1.msra.mxu0 0.0
    %577 = vmatprep.subr.mxu0 0.0
    %578 = vmatpush1.msra.mxu0 0.0
    %579 = vmatprep.subr.mxu0 0.0
    %580 = vmatpush1.msra.mxu0 0.0
    %581 = vmatprep.subr.mxu0 0.0
    %582 = vmatpush1.msra.mxu0 0.0
    %583 = vmatprep.subr.mxu0 0.0
    %584 = vmatpush1.msra.mxu0 0.0
    %585 = vmatprep.subr.mxu0 0.0
    %586 = vmatpush1.msra.mxu0 0.0
    %587 = vmatprep.subr.mxu0 0.0
    %588 = vmatpush1.msra.mxu0 0.0
    %589 = vmatprep.subr.mxu0 0.0
    %590 = vmatpush1.msra.mxu0 0.0
    %591 = vmatprep.subr.mxu0 0.0
    %592 = vmatpush1.msra.mxu0 0.0
    %593 = vmatprep.subr.mxu0 0.0
    %594 = vmatpush1.msra.mxu0 0.0
    %595 = vmatprep.subr.mxu0 0.0
    %596 = vmatpush1.msra.mxu0 0.0
    %597 = vmatprep.subr.mxu0 0.0
    %598 = vmatpush1.msra.mxu0 0.0
    %599 = vmatprep.subr.mxu0 0.0
    %600 = vmatpush1.msra.mxu0 0.0
    %601 = vmatprep.subr.mxu0 0.0
    %602 = vmatpush1.msra.mxu0 0.0
    %603 = vmatprep.subr.mxu0 0.0
    %604 = vmatpush1.msra.mxu0 0.0
    %605 = vmatprep.subr.mxu0 0.0
    %606 = vmatpush1.msra.mxu0 0.0
    %607 = vmatprep.mubr.f32.mxu0 0.0
    %608 = vmatmul.mubr.f32.gmra.mrb[0].mxu0 %v541
    %v609 = vpop.f32.mrb[0].mxu0
    %v610 = vadd.f32 0.0, %v609
    %v611 = vpop.f32.mrb[0].mxu0
    %612 = vdwg.mxu0
    %v613 = vmul.f32 %v610, 0.03125
    %v614 = vmul.f32 %v521, %v521
    %v615 = vmul.f32 %v526, %v526
    %v616 = vmul.f32 %v531, %v531
    %v617 = vmul.f32 %v536, %v536
    %618 = vmatprep.subr.mxu0 0.0
    %619 = vmatpush1.msra.mxu0 %v614
    %620 = vmatprep.subr.mxu0 0.0
    %621 = vmatpush1.msra.mxu0 %v615
    %622 = vmatprep.subr.mxu0 0.0
    %623 = vmatpush1.msra.mxu0 %v616
    %624 = vmatprep.subr.mxu0 0.0
    %625 = vmatpush1.msra.mxu0 %v617
    %626 = vmatprep.subr.mxu0 0.0
    %627 = vmatpush1.msra.mxu0 0.0
    %628 = vmatprep.subr.mxu0 0.0
    %629 = vmatpush1.msra.mxu0 0.0
    %630 = vmatprep.subr.mxu0 0.0
    %631 = vmatpush1.msra.mxu0 0.0
    %632 = vmatprep.subr.mxu0 0.0
    %633 = vmatpush1.msra.mxu0 0.0
    %634 = vmatprep.subr.mxu0 0.0
    %635 = vmatpush1.msra.mxu0 0.0
    %636 = vmatprep.subr.mxu0 0.0
    %637 = vmatpush1.msra.mxu0 0.0
    %638 = vmatprep.subr.mxu0 0.0
    %639 = vmatpush1.msra.mxu0 0.0
    %640 = vmatprep.subr.mxu0 0.0
    %641 = vmatpush1.msra.mxu0 0.0
    %642 = vmatprep.subr.mxu0 0.0
    %643 = vmatpush1.msra.mxu0 0.0
    %644 = vmatprep.subr.mxu0 0.0
    %645 = vmatpush1.msra.mxu0 0.0
    %646 = vmatprep.subr.mxu0 0.0
    %647 = vmatpush1.msra.mxu0 0.0
    %648 = vmatprep.subr.mxu0 0.0
    %649 = vmatpush1.msra.mxu0 0.0
    %650 = vmatprep.subr.mxu0 0.0
    %651 = vmatpush1.msra.mxu0 0.0
    %652 = vmatprep.subr.mxu0 0.0
    %653 = vmatpush1.msra.mxu0 0.0
    %654 = vmatprep.subr.mxu0 0.0
    %655 = vmatpush1.msra.mxu0 0.0
    %656 = vmatprep.subr.mxu0 0.0
    %657 = vmatpush1.msra.mxu0 0.0
    %658 = vmatprep.subr.mxu0 0.0
    %659 = vmatpush1.msra.mxu0 0.0
    %660 = vmatprep.subr.mxu0 0.0
    %661 = vmatpush1.msra.mxu0 0.0
    %662 = vmatprep.subr.mxu0 0.0
    %663 = vmatpush1.msra.mxu0 0.0
    %664 = vmatprep.subr.mxu0 0.0
    %665 = vmatpush1.msra.mxu0 0.0
    %666 = vmatprep.subr.mxu0 0.0
    %667 = vmatpush1.msra.mxu0 0.0
    %668 = vmatprep.subr.mxu0 0.0
    %669 = vmatpush1.msra.mxu0 0.0
    %670 = vmatprep.subr.mxu0 0.0
    %671 = vmatpush1.msra.mxu0 0.0
    %672 = vmatprep.subr.mxu0 0.0
    %673 = vmatpush1.msra.mxu0 0.0
    %674 = vmatprep.subr.mxu0 0.0
    %675 = vmatpush1.msra.mxu0 0.0
    %676 = vmatprep.subr.mxu0 0.0
    %677 = vmatpush1.msra.mxu0 0.0
    %678 = vmatprep.subr.mxu0 0.0
    %679 = vmatpush1.msra.mxu0 0.0
    %680 = vmatprep.subr.mxu0 0.0
    %681 = vmatpush1.msra.mxu0 0.0
    %682 = vmatprep.mubr.f32.mxu0 0.0
    %683 = vmatmul.mubr.f32.gmra.mrb[0].mxu0 %v541
    %v684 = vpop.f32.mrb[0].mxu0
    %v685 = vadd.f32 0.0, %v684
    %v686 = vpop.f32.mrb[0].mxu0
    %687 = vdwg.mxu0
    %v688 = vmul.f32 %v685, 0.03125
    %v689 = vmul.f32 %v613, %v613
    %v690 = vsub.f32 %v688, %v689
    %v691 = vmax.f32 %v690, 0.0
    %v692 = vadd.f32 %v691, 1e-05
    %v693 = vrsqrt.pop %v692
    %v694 = vmul.f32 %v693, %v68
    %v695 = vlaneseq
    %v696 = vshrl.u32 %v695, 7
    %v697 = vsub.s32 0, %v696
    %v698 = vrot.slane %v613, %v697
    %v699 = vsub.f32 %v521, %v698
    %v700 = vsub.f32 %v526, %v698
    %v701 = vsub.f32 %v531, %v698
    %v702 = vsub.f32 %v536, %v698
    %v703 = vlaneseq
    %v704 = vshrl.u32 %v703, 7
    %v705 = vsub.s32 0, %v704
    %v706 = vrot.slane %v694, %v705
    %v707 = vmul.f32 %v699, %v706
    %v708 = vmul.f32 %v700, %v706
    %v709 = vmul.f32 %v701, %v706
    %v710 = vmul.f32 %v702, %v706
    %v712 = vlaneseq
    %v713 = vshrl.u32 %v712, 7
    %v714 = vsub.s32 0, %v713
    %v715 = vrot.slane %v69, %v714
    %v717 = vadd.f32 %v707, %v715
    %v718 = vadd.f32 %v708, %v715
    %v719 = vadd.f32 %v709, %v715
    %v720 = vadd.f32 %v710, %v715
    %v721 = vmax.f32 %v717, 0.0
    %v722 = vmax.f32 %v718, 0.0
    %v723 = vmax.f32 %v719, 0.0
    %v724 = vmax.f32 %v720, 0.0
    %v725 = vld [vmem:[%s3] sm:$0xff]
    %v727 = vsel %vm72, %v725, 0
    %729 = vmatprep.subr.mxu0 0.0
    %730 = vmatpush1.msra.mxu0 %v721
    %731 = vmatprep.subr.mxu0 0.0
    %732 = vmatpush1.msra.mxu0 %v722
    %733 = vmatprep.subr.mxu0 0.0
    %734 = vmatpush1.msra.mxu0 0.0
    %735 = vmatprep.subr.mxu0 0.0
    %736 = vmatpush1.msra.mxu0 0.0
    %737 = vmatprep.subr.mxu0 0.0
    %738 = vmatpush1.msra.mxu0 0.0
    %739 = vmatprep.subr.mxu0 0.0
    %740 = vmatpush1.msra.mxu0 0.0
    %741 = vmatprep.subr.mxu0 0.0
    %742 = vmatpush1.msra.mxu0 0.0
    %743 = vmatprep.subr.mxu0 0.0
    %744 = vmatpush1.msra.mxu0 0.0
    %745 = vmatprep.subr.mxu0 0.0
    %746 = vmatpush1.msra.mxu0 0.0
    %747 = vmatprep.subr.mxu0 0.0
    %748 = vmatpush1.msra.mxu0 0.0
    %749 = vmatprep.subr.mxu0 0.0
    %750 = vmatpush1.msra.mxu0 0.0
    %751 = vmatprep.subr.mxu0 0.0
    %752 = vmatpush1.msra.mxu0 0.0
    %753 = vmatprep.subr.mxu0 0.0
    %754 = vmatpush1.msra.mxu0 0.0
    %755 = vmatprep.subr.mxu0 0.0
    %756 = vmatpush1.msra.mxu0 0.0
    %757 = vmatprep.subr.mxu0 0.0
    %758 = vmatpush1.msra.mxu0 0.0
    %759 = vmatprep.subr.mxu0 0.0
    %760 = vmatpush1.msra.mxu0 0.0
    %761 = vmatprep.subr.mxu0 0.0
    %762 = vmatpush1.msra.mxu0 0.0
    %763 = vmatprep.subr.mxu0 0.0
    %764 = vmatpush1.msra.mxu0 0.0
    %765 = vmatprep.subr.mxu0 0.0
    %766 = vmatpush1.msra.mxu0 0.0
    %767 = vmatprep.subr.mxu0 0.0
    %768 = vmatpush1.msra.mxu0 0.0
    %769 = vmatprep.subr.mxu0 0.0
    %770 = vmatpush1.msra.mxu0 0.0
    %771 = vmatprep.subr.mxu0 0.0
    %772 = vmatpush1.msra.mxu0 0.0
    %773 = vmatprep.subr.mxu0 0.0
    %774 = vmatpush1.msra.mxu0 0.0
    %775 = vmatprep.subr.mxu0 0.0
    %776 = vmatpush1.msra.mxu0 0.0
    %777 = vmatprep.subr.mxu0 0.0
    %778 = vmatpush1.msra.mxu0 0.0
    %779 = vmatprep.subr.mxu0 0.0
    %780 = vmatpush1.msra.mxu0 0.0
    %781 = vmatprep.subr.mxu0 0.0
    %782 = vmatpush1.msra.mxu0 0.0
    %783 = vmatprep.subr.mxu0 0.0
    %784 = vmatpush1.msra.mxu0 0.0
    %785 = vmatprep.subr.mxu0 0.0
    %786 = vmatpush1.msra.mxu0 0.0
    %787 = vmatprep.subr.mxu0 0.0
    %788 = vmatpush1.msra.mxu0 0.0
    %789 = vmatprep.subr.mxu0 0.0
    %790 = vmatpush1.msra.mxu0 0.0
    %791 = vmatprep.subr.mxu0 0.0
    %792 = vmatpush1.msra.mxu0 0.0
    %793 = vmatprep.mubr.f32.mxu0 0.0
    %794 = vmatmul.mubr.f32.gmra.mrb[0].mxu0 %v727
    %v795 = vpop.f32.mrb[0].mxu0
    %v796 = vadd.f32 0.0, %v795
    %v797 = vpop.f32.mrb[0].mxu0
    %798 = vdwg.mxu0
    %799 = vmatprep.subr.mxu0 0.0
    %800 = vmatpush1.msra.mxu0 %v723
    %801 = vmatprep.subr.mxu0 0.0
    %802 = vmatpush1.msra.mxu0 %v724
    %803 = vmatprep.subr.mxu0 0.0
    %804 = vmatpush1.msra.mxu0 0.0
    %805 = vmatprep.subr.mxu0 0.0
    %806 = vmatpush1.msra.mxu0 0.0
    %807 = vmatprep.subr.mxu0 0.0
    %808 = vmatpush1.msra.mxu0 0.0
    %809 = vmatprep.subr.mxu0 0.0
    %810 = vmatpush1.msra.mxu0 0.0
    %811 = vmatprep.subr.mxu0 0.0
    %812 = vmatpush1.msra.mxu0 0.0
    %813 = vmatprep.subr.mxu0 0.0
    %814 = vmatpush1.msra.mxu0 0.0
    %815 = vmatprep.subr.mxu0 0.0
    %816 = vmatpush1.msra.mxu0 0.0
    %817 = vmatprep.subr.mxu0 0.0
    %818 = vmatpush1.msra.mxu0 0.0
    %819 = vmatprep.subr.mxu0 0.0
    %820 = vmatpush1.msra.mxu0 0.0
    %821 = vmatprep.subr.mxu0 0.0
    %822 = vmatpush1.msra.mxu0 0.0
    %823 = vmatprep.subr.mxu0 0.0
    %824 = vmatpush1.msra.mxu0 0.0
    %825 = vmatprep.subr.mxu0 0.0
    %826 = vmatpush1.msra.mxu0 0.0
    %827 = vmatprep.subr.mxu0 0.0
    %828 = vmatpush1.msra.mxu0 0.0
    %829 = vmatprep.subr.mxu0 0.0
    %830 = vmatpush1.msra.mxu0 0.0
    %831 = vmatprep.subr.mxu0 0.0
    %832 = vmatpush1.msra.mxu0 0.0
    %833 = vmatprep.subr.mxu0 0.0
    %834 = vmatpush1.msra.mxu0 0.0
    %835 = vmatprep.subr.mxu0 0.0
    %836 = vmatpush1.msra.mxu0 0.0
    %837 = vmatprep.subr.mxu0 0.0
    %838 = vmatpush1.msra.mxu0 0.0
    %839 = vmatprep.subr.mxu0 0.0
    %840 = vmatpush1.msra.mxu0 0.0
    %841 = vmatprep.subr.mxu0 0.0
    %842 = vmatpush1.msra.mxu0 0.0
    %843 = vmatprep.subr.mxu0 0.0
    %844 = vmatpush1.msra.mxu0 0.0
    %845 = vmatprep.subr.mxu0 0.0
    %846 = vmatpush1.msra.mxu0 0.0
    %847 = vmatprep.subr.mxu0 0.0
    %848 = vmatpush1.msra.mxu0 0.0
    %849 = vmatprep.subr.mxu0 0.0
    %850 = vmatpush1.msra.mxu0 0.0
    %851 = vmatprep.subr.mxu0 0.0
    %852 = vmatpush1.msra.mxu0 0.0
    %853 = vmatprep.subr.mxu0 0.0
    %854 = vmatpush1.msra.mxu0 0.0
    %855 = vmatprep.subr.mxu0 0.0
    %856 = vmatpush1.msra.mxu0 0.0
    %857 = vmatprep.subr.mxu0 0.0
    %858 = vmatpush1.msra.mxu0 0.0
    %859 = vmatprep.subr.mxu0 0.0
    %860 = vmatpush1.msra.mxu0 0.0
    %861 = vmatprep.subr.mxu0 0.0
    %862 = vmatpush1.msra.mxu0 0.0
    %863 = vmatprep.mubr.f32.mxu0 0.0
    %864 = vmatmul.mubr.f32.gmra.mrb[0].mxu0 %v727
    %v865 = vpop.f32.mrb[0].mxu0
    %v866 = vadd.f32 0.0, %v865
    %v867 = vpop.f32.mrb[0].mxu0
    %868 = vdwg.mxu0
    %v869 = vld [vmem:[%s4] sm:$0xff]
    %v871 = vsel %vm72, %v869, 0
    %873 = vmatprep.subr.mxu0 0.0
    %874 = vmatpush1.msra.mxu0 %v721
    %875 = vmatprep.subr.mxu0 0.0
    %876 = vmatpush1.msra.mxu0 %v722
    %877 = vmatprep.subr.mxu0 0.0
    %878 = vmatpush1.msra.mxu0 0.0
    %879 = vmatprep.subr.mxu0 0.0
    %880 = vmatpush1.msra.mxu0 0.0
    %881 = vmatprep.subr.mxu0 0.0
    %882 = vmatpush1.msra.mxu0 0.0
    %883 = vmatprep.subr.mxu0 0.0
    %884 = vmatpush1.msra.mxu0 0.0
    %885 = vmatprep.subr.mxu0 0.0
    %886 = vmatpush1.msra.mxu0 0.0
    %887 = vmatprep.subr.mxu0 0.0
    %888 = vmatpush1.msra.mxu0 0.0
    %889 = vmatprep.subr.mxu0 0.0
    %890 = vmatpush1.msra.mxu0 0.0
    %891 = vmatprep.subr.mxu0 0.0
    %892 = vmatpush1.msra.mxu0 0.0
    %893 = vmatprep.subr.mxu0 0.0
    %894 = vmatpush1.msra.mxu0 0.0
    %895 = vmatprep.subr.mxu0 0.0
    %896 = vmatpush1.msra.mxu0 0.0
    %897 = vmatprep.subr.mxu0 0.0
    %898 = vmatpush1.msra.mxu0 0.0
    %899 = vmatprep.subr.mxu0 0.0
    %900 = vmatpush1.msra.mxu0 0.0
    %901 = vmatprep.subr.mxu0 0.0
    %902 = vmatpush1.msra.mxu0 0.0
    %903 = vmatprep.subr.mxu0 0.0
    %904 = vmatpush1.msra.mxu0 0.0
    %905 = vmatprep.subr.mxu0 0.0
    %906 = vmatpush1.msra.mxu0 0.0
    %907 = vmatprep.subr.mxu0 0.0
    %908 = vmatpush1.msra.mxu0 0.0
    %909 = vmatprep.subr.mxu0 0.0
    %910 = vmatpush1.msra.mxu0 0.0
    %911 = vmatprep.subr.mxu0 0.0
    %912 = vmatpush1.msra.mxu0 0.0
    %913 = vmatprep.subr.mxu0 0.0
    %914 = vmatpush1.msra.mxu0 0.0
    %915 = vmatprep.subr.mxu0 0.0
    %916 = vmatpush1.msra.mxu0 0.0
    %917 = vmatprep.subr.mxu0 0.0
    %918 = vmatpush1.msra.mxu0 0.0
    %919 = vmatprep.subr.mxu0 0.0
    %920 = vmatpush1.msra.mxu0 0.0
    %921 = vmatprep.subr.mxu0 0.0
    %922 = vmatpush1.msra.mxu0 0.0
    %923 = vmatprep.subr.mxu0 0.0
    %924 = vmatpush1.msra.mxu0 0.0
    %925 = vmatprep.subr.mxu0 0.0
    %926 = vmatpush1.msra.mxu0 0.0
    %927 = vmatprep.subr.mxu0 0.0
    %928 = vmatpush1.msra.mxu0 0.0
    %929 = vmatprep.subr.mxu0 0.0
    %930 = vmatpush1.msra.mxu0 0.0
    %931 = vmatprep.subr.mxu0 0.0
    %932 = vmatpush1.msra.mxu0 0.0
    %933 = vmatprep.subr.mxu0 0.0
    %934 = vmatpush1.msra.mxu0 0.0
    %935 = vmatprep.subr.mxu0 0.0
    %936 = vmatpush1.msra.mxu0 0.0
    %937 = vmatprep.mubr.f32.mxu0 0.0
    %938 = vmatmul.mubr.f32.gmra.mrb[0].mxu0 %v871
    %v939 = vpop.f32.mrb[0].mxu0
    %v940 = vadd.f32 0.0, %v939
    %v941 = vpop.f32.mrb[0].mxu0
    %942 = vdwg.mxu0
    %943 = vmatprep.subr.mxu0 0.0
    %944 = vmatpush1.msra.mxu0 %v723
    %945 = vmatprep.subr.mxu0 0.0
    %946 = vmatpush1.msra.mxu0 %v724
    %947 = vmatprep.subr.mxu0 0.0
    %948 = vmatpush1.msra.mxu0 0.0
    %949 = vmatprep.subr.mxu0 0.0
    %950 = vmatpush1.msra.mxu0 0.0
    %951 = vmatprep.subr.mxu0 0.0
    %952 = vmatpush1.msra.mxu0 0.0
    %953 = vmatprep.subr.mxu0 0.0
    %954 = vmatpush1.msra.mxu0 0.0
    %955 = vmatprep.subr.mxu0 0.0
    %956 = vmatpush1.msra.mxu0 0.0
    %957 = vmatprep.subr.mxu0 0.0
    %958 = vmatpush1.msra.mxu0 0.0
    %959 = vmatprep.subr.mxu0 0.0
    %960 = vmatpush1.msra.mxu0 0.0
    %961 = vmatprep.subr.mxu0 0.0
    %962 = vmatpush1.msra.mxu0 0.0
    %963 = vmatprep.subr.mxu0 0.0
    %964 = vmatpush1.msra.mxu0 0.0
    %965 = vmatprep.subr.mxu0 0.0
    %966 = vmatpush1.msra.mxu0 0.0
    %967 = vmatprep.subr.mxu0 0.0
    %968 = vmatpush1.msra.mxu0 0.0
    %969 = vmatprep.subr.mxu0 0.0
    %970 = vmatpush1.msra.mxu0 0.0
    %971 = vmatprep.subr.mxu0 0.0
    %972 = vmatpush1.msra.mxu0 0.0
    %973 = vmatprep.subr.mxu0 0.0
    %974 = vmatpush1.msra.mxu0 0.0
    %975 = vmatprep.subr.mxu0 0.0
    %976 = vmatpush1.msra.mxu0 0.0
    %977 = vmatprep.subr.mxu0 0.0
    %978 = vmatpush1.msra.mxu0 0.0
    %979 = vmatprep.subr.mxu0 0.0
    %980 = vmatpush1.msra.mxu0 0.0
    %981 = vmatprep.subr.mxu0 0.0
    %982 = vmatpush1.msra.mxu0 0.0
    %983 = vmatprep.subr.mxu0 0.0
    %984 = vmatpush1.msra.mxu0 0.0
    %985 = vmatprep.subr.mxu0 0.0
    %986 = vmatpush1.msra.mxu0 0.0
    %987 = vmatprep.subr.mxu0 0.0
    %988 = vmatpush1.msra.mxu0 0.0
    %989 = vmatprep.subr.mxu0 0.0
    %990 = vmatpush1.msra.mxu0 0.0
    %991 = vmatprep.subr.mxu0 0.0
    %992 = vmatpush1.msra.mxu0 0.0
    %993 = vmatprep.subr.mxu0 0.0
    %994 = vmatpush1.msra.mxu0 0.0
    %995 = vmatprep.subr.mxu0 0.0
    %996 = vmatpush1.msra.mxu0 0.0
    %997 = vmatprep.subr.mxu0 0.0
    %998 = vmatpush1.msra.mxu0 0.0
    %999 = vmatprep.subr.mxu0 0.0
    %1000 = vmatpush1.msra.mxu0 0.0
    %1001 = vmatprep.subr.mxu0 0.0
    %1002 = vmatpush1.msra.mxu0 0.0
    %1003 = vmatprep.subr.mxu0 0.0
    %1004 = vmatpush1.msra.mxu0 0.0
    %1005 = vmatprep.subr.mxu0 0.0
    %1006 = vmatpush1.msra.mxu0 0.0
    %1007 = vmatprep.mubr.f32.mxu0 0.0
    %1008 = vmatmul.mubr.f32.gmra.mrb[0].mxu0 %v871
    %v1009 = vpop.f32.mrb[0].mxu0
    %v1010 = vadd.f32 0.0, %v1009
    %v1011 = vpop.f32.mrb[0].mxu0
    %1012 = vdwg.mxu0
    %v1013 = vmax.f32 %v796, %v940
    %v1014 = vmax.f32 %v866, %v1010
    %v1015 = vld [vmem:[%s12] sm:$0x1]
    %v1016 = vld [vmem:[%s13] sm:$0x1]
    %v1017 = vld [vmem:[%s14] sm:$0x1]
    %v1018 = vld [vmem:[%s5] sm:$0xff]
    %v1020 = vsel %vm424, %v1018, 0
    %1022 = vmatprep.subr.mxu0 0.0
    %1023 = vmatpush1.msra.mxu0 %v1013
    %1024 = vmatprep.subr.mxu0 0.0
    %1025 = vmatpush1.msra.mxu0 0.0
    %1026 = vmatprep.subr.mxu0 0.0
    %1027 = vmatpush1.msra.mxu0 0.0
    %1028 = vmatprep.subr.mxu0 0.0
    %1029 = vmatpush1.msra.mxu0 0.0
    %1030 = vmatprep.subr.mxu0 0.0
    %1031 = vmatpush1.msra.mxu0 0.0
    %1032 = vmatprep.subr.mxu0 0.0
    %1033 = vmatpush1.msra.mxu0 0.0
    %1034 = vmatprep.subr.mxu0 0.0
    %1035 = vmatpush1.msra.mxu0 0.0
    %1036 = vmatprep.subr.mxu0 0.0
    %1037 = vmatpush1.msra.mxu0 0.0
    %1038 = vmatprep.subr.mxu0 0.0
    %1039 = vmatpush1.msra.mxu0 0.0
    %1040 = vmatprep.subr.mxu0 0.0
    %1041 = vmatpush1.msra.mxu0 0.0
    %1042 = vmatprep.subr.mxu0 0.0
    %1043 = vmatpush1.msra.mxu0 0.0
    %1044 = vmatprep.subr.mxu0 0.0
    %1045 = vmatpush1.msra.mxu0 0.0
    %1046 = vmatprep.subr.mxu0 0.0
    %1047 = vmatpush1.msra.mxu0 0.0
    %1048 = vmatprep.subr.mxu0 0.0
    %1049 = vmatpush1.msra.mxu0 0.0
    %1050 = vmatprep.subr.mxu0 0.0
    %1051 = vmatpush1.msra.mxu0 0.0
    %1052 = vmatprep.subr.mxu0 0.0
    %1053 = vmatpush1.msra.mxu0 0.0
    %1054 = vmatprep.subr.mxu0 0.0
    %1055 = vmatpush1.msra.mxu0 0.0
    %1056 = vmatprep.subr.mxu0 0.0
    %1057 = vmatpush1.msra.mxu0 0.0
    %1058 = vmatprep.subr.mxu0 0.0
    %1059 = vmatpush1.msra.mxu0 0.0
    %1060 = vmatprep.subr.mxu0 0.0
    %1061 = vmatpush1.msra.mxu0 0.0
    %1062 = vmatprep.subr.mxu0 0.0
    %1063 = vmatpush1.msra.mxu0 0.0
    %1064 = vmatprep.subr.mxu0 0.0
    %1065 = vmatpush1.msra.mxu0 0.0
    %1066 = vmatprep.subr.mxu0 0.0
    %1067 = vmatpush1.msra.mxu0 0.0
    %1068 = vmatprep.subr.mxu0 0.0
    %1069 = vmatpush1.msra.mxu0 0.0
    %1070 = vmatprep.subr.mxu0 0.0
    %1071 = vmatpush1.msra.mxu0 0.0
    %1072 = vmatprep.subr.mxu0 0.0
    %1073 = vmatpush1.msra.mxu0 0.0
    %1074 = vmatprep.subr.mxu0 0.0
    %1075 = vmatpush1.msra.mxu0 0.0
    %1076 = vmatprep.subr.mxu0 0.0
    %1077 = vmatpush1.msra.mxu0 0.0
    %1078 = vmatprep.subr.mxu0 0.0
    %1079 = vmatpush1.msra.mxu0 0.0
    %1080 = vmatprep.subr.mxu0 0.0
    %1081 = vmatpush1.msra.mxu0 0.0
    %1082 = vmatprep.subr.mxu0 0.0
    %1083 = vmatpush1.msra.mxu0 0.0
    %1084 = vmatprep.subr.mxu0 0.0
    %1085 = vmatpush1.msra.mxu0 0.0
    %1086 = vmatprep.mubr.f32.mxu0 0.0
    %1087 = vmatmul.mubr.f32.gmra.mrb[0].mxu0 %v1020
    %v1088 = vpop.f32.mrb[0].mxu0
    %v1089 = vadd.f32 0.0, %v1088
    %v1090 = vpop.f32.mrb[0].mxu0
    %1091 = vdwg.mxu0
    %1092 = vmatprep.subr.mxu0 0.0
    %1093 = vmatpush1.msra.mxu0 %v1014
    %1094 = vmatprep.subr.mxu0 0.0
    %1095 = vmatpush1.msra.mxu0 0.0
    %1096 = vmatprep.subr.mxu0 0.0
    %1097 = vmatpush1.msra.mxu0 0.0
    %1098 = vmatprep.subr.mxu0 0.0
    %1099 = vmatpush1.msra.mxu0 0.0
    %1100 = vmatprep.subr.mxu0 0.0
    %1101 = vmatpush1.msra.mxu0 0.0
    %1102 = vmatprep.subr.mxu0 0.0
    %1103 = vmatpush1.msra.mxu0 0.0
    %1104 = vmatprep.subr.mxu0 0.0
    %1105 = vmatpush1.msra.mxu0 0.0
    %1106 = vmatprep.subr.mxu0 0.0
    %1107 = vmatpush1.msra.mxu0 0.0
    %1108 = vmatprep.subr.mxu0 0.0
    %1109 = vmatpush1.msra.mxu0 0.0
    %1110 = vmatprep.subr.mxu0 0.0
    %1111 = vmatpush1.msra.mxu0 0.0
    %1112 = vmatprep.subr.mxu0 0.0
    %1113 = vmatpush1.msra.mxu0 0.0
    %1114 = vmatprep.subr.mxu0 0.0
    %1115 = vmatpush1.msra.mxu0 0.0
    %1116 = vmatprep.subr.mxu0 0.0
    %1117 = vmatpush1.msra.mxu0 0.0
    %1118 = vmatprep.subr.mxu0 0.0
    %1119 = vmatpush1.msra.mxu0 0.0
    %1120 = vmatprep.subr.mxu0 0.0
    %1121 = vmatpush1.msra.mxu0 0.0
    %1122 = vmatprep.subr.mxu0 0.0
    %1123 = vmatpush1.msra.mxu0 0.0
    %1124 = vmatprep.subr.mxu0 0.0
    %1125 = vmatpush1.msra.mxu0 0.0
    %1126 = vmatprep.subr.mxu0 0.0
    %1127 = vmatpush1.msra.mxu0 0.0
    %1128 = vmatprep.subr.mxu0 0.0
    %1129 = vmatpush1.msra.mxu0 0.0
    %1130 = vmatprep.subr.mxu0 0.0
    %1131 = vmatpush1.msra.mxu0 0.0
    %1132 = vmatprep.subr.mxu0 0.0
    %1133 = vmatpush1.msra.mxu0 0.0
    %1134 = vmatprep.subr.mxu0 0.0
    %1135 = vmatpush1.msra.mxu0 0.0
    %1136 = vmatprep.subr.mxu0 0.0
    %1137 = vmatpush1.msra.mxu0 0.0
    %1138 = vmatprep.subr.mxu0 0.0
    %1139 = vmatpush1.msra.mxu0 0.0
    %1140 = vmatprep.subr.mxu0 0.0
    %1141 = vmatpush1.msra.mxu0 0.0
    %1142 = vmatprep.subr.mxu0 0.0
    %1143 = vmatpush1.msra.mxu0 0.0
    %1144 = vmatprep.subr.mxu0 0.0
    %1145 = vmatpush1.msra.mxu0 0.0
    %1146 = vmatprep.subr.mxu0 0.0
    %1147 = vmatpush1.msra.mxu0 0.0
    %1148 = vmatprep.subr.mxu0 0.0
    %1149 = vmatpush1.msra.mxu0 0.0
    %1150 = vmatprep.subr.mxu0 0.0
    %1151 = vmatpush1.msra.mxu0 0.0
    %1152 = vmatprep.subr.mxu0 0.0
    %1153 = vmatpush1.msra.mxu0 0.0
    %1154 = vmatprep.subr.mxu0 0.0
    %1155 = vmatpush1.msra.mxu0 0.0
    %1156 = vmatprep.mubr.f32.mxu0 0.0
    %1157 = vmatmul.mubr.f32.gmra.mrb[0].mxu0 %v1020
    %v1158 = vpop.f32.mrb[0].mxu0
    %v1159 = vadd.f32 0.0, %v1158
    %v1160 = vpop.f32.mrb[0].mxu0
    %1161 = vdwg.mxu0
    %v1162 = vld [vmem:[%s6] sm:$0xff]
    %v1164 = vsel %vm424, %v1162, 0
    %1166 = vmatprep.subr.mxu0 0.0
    %1167 = vmatpush1.msra.mxu0 %v1013
    %1168 = vmatprep.subr.mxu0 0.0
    %1169 = vmatpush1.msra.mxu0 0.0
    %1170 = vmatprep.subr.mxu0 0.0
    %1171 = vmatpush1.msra.mxu0 0.0
    %1172 = vmatprep.subr.mxu0 0.0
    %1173 = vmatpush1.msra.mxu0 0.0
    %1174 = vmatprep.subr.mxu0 0.0
    %1175 = vmatpush1.msra.mxu0 0.0
    %1176 = vmatprep.subr.mxu0 0.0
    %1177 = vmatpush1.msra.mxu0 0.0
    %1178 = vmatprep.subr.mxu0 0.0
    %1179 = vmatpush1.msra.mxu0 0.0
    %1180 = vmatprep.subr.mxu0 0.0
    %1181 = vmatpush1.msra.mxu0 0.0
    %1182 = vmatprep.subr.mxu0 0.0
    %1183 = vmatpush1.msra.mxu0 0.0
    %1184 = vmatprep.subr.mxu0 0.0
    %1185 = vmatpush1.msra.mxu0 0.0
    %1186 = vmatprep.subr.mxu0 0.0
    %1187 = vmatpush1.msra.mxu0 0.0
    %1188 = vmatprep.subr.mxu0 0.0
    %1189 = vmatpush1.msra.mxu0 0.0
    %1190 = vmatprep.subr.mxu0 0.0
    %1191 = vmatpush1.msra.mxu0 0.0
    %1192 = vmatprep.subr.mxu0 0.0
    %1193 = vmatpush1.msra.mxu0 0.0
    %1194 = vmatprep.subr.mxu0 0.0
    %1195 = vmatpush1.msra.mxu0 0.0
    %1196 = vmatprep.subr.mxu0 0.0
    %1197 = vmatpush1.msra.mxu0 0.0
    %1198 = vmatprep.subr.mxu0 0.0
    %1199 = vmatpush1.msra.mxu0 0.0
    %1200 = vmatprep.subr.mxu0 0.0
    %1201 = vmatpush1.msra.mxu0 0.0
    %1202 = vmatprep.subr.mxu0 0.0
    %1203 = vmatpush1.msra.mxu0 0.0
    %1204 = vmatprep.subr.mxu0 0.0
    %1205 = vmatpush1.msra.mxu0 0.0
    %1206 = vmatprep.subr.mxu0 0.0
    %1207 = vmatpush1.msra.mxu0 0.0
    %1208 = vmatprep.subr.mxu0 0.0
    %1209 = vmatpush1.msra.mxu0 0.0
    %1210 = vmatprep.subr.mxu0 0.0
    %1211 = vmatpush1.msra.mxu0 0.0
    %1212 = vmatprep.subr.mxu0 0.0
    %1213 = vmatpush1.msra.mxu0 0.0
    %1214 = vmatprep.subr.mxu0 0.0
    %1215 = vmatpush1.msra.mxu0 0.0
    %1216 = vmatprep.subr.mxu0 0.0
    %1217 = vmatpush1.msra.mxu0 0.0
    %1218 = vmatprep.subr.mxu0 0.0
    %1219 = vmatpush1.msra.mxu0 0.0
    %1220 = vmatprep.subr.mxu0 0.0
    %1221 = vmatpush1.msra.mxu0 0.0
    %1222 = vmatprep.subr.mxu0 0.0
    %1223 = vmatpush1.msra.mxu0 0.0
    %1224 = vmatprep.subr.mxu0 0.0
    %1225 = vmatpush1.msra.mxu0 0.0
    %1226 = vmatprep.subr.mxu0 0.0
    %1227 = vmatpush1.msra.mxu0 0.0
    %1228 = vmatprep.subr.mxu0 0.0
    %1229 = vmatpush1.msra.mxu0 0.0
    %1230 = vmatprep.mubr.f32.mxu0 0.0
    %1231 = vmatmul.mubr.f32.gmra.mrb[0].mxu0 %v1164
    %v1232 = vpop.f32.mrb[0].mxu0
    %v1233 = vadd.f32 0.0, %v1232
    %v1234 = vpop.f32.mrb[0].mxu0
    %1235 = vdwg.mxu0
    %1236 = vmatprep.subr.mxu0 0.0
    %1237 = vmatpush1.msra.mxu0 %v1014
    %1238 = vmatprep.subr.mxu0 0.0
    %1239 = vmatpush1.msra.mxu0 0.0
    %1240 = vmatprep.subr.mxu0 0.0
    %1241 = vmatpush1.msra.mxu0 0.0
    %1242 = vmatprep.subr.mxu0 0.0
    %1243 = vmatpush1.msra.mxu0 0.0
    %1244 = vmatprep.subr.mxu0 0.0
    %1245 = vmatpush1.msra.mxu0 0.0
    %1246 = vmatprep.subr.mxu0 0.0
    %1247 = vmatpush1.msra.mxu0 0.0
    %1248 = vmatprep.subr.mxu0 0.0
    %1249 = vmatpush1.msra.mxu0 0.0
    %1250 = vmatprep.subr.mxu0 0.0
    %1251 = vmatpush1.msra.mxu0 0.0
    %1252 = vmatprep.subr.mxu0 0.0
    %1253 = vmatpush1.msra.mxu0 0.0
    %1254 = vmatprep.subr.mxu0 0.0
    %1255 = vmatpush1.msra.mxu0 0.0
    %1256 = vmatprep.subr.mxu0 0.0
    %1257 = vmatpush1.msra.mxu0 0.0
    %1258 = vmatprep.subr.mxu0 0.0
    %1259 = vmatpush1.msra.mxu0 0.0
    %1260 = vmatprep.subr.mxu0 0.0
    %1261 = vmatpush1.msra.mxu0 0.0
    %1262 = vmatprep.subr.mxu0 0.0
    %1263 = vmatpush1.msra.mxu0 0.0
    %1264 = vmatprep.subr.mxu0 0.0
    %1265 = vmatpush1.msra.mxu0 0.0
    %1266 = vmatprep.subr.mxu0 0.0
    %1267 = vmatpush1.msra.mxu0 0.0
    %1268 = vmatprep.subr.mxu0 0.0
    %1269 = vmatpush1.msra.mxu0 0.0
    %1270 = vmatprep.subr.mxu0 0.0
    %1271 = vmatpush1.msra.mxu0 0.0
    %1272 = vmatprep.subr.mxu0 0.0
    %1273 = vmatpush1.msra.mxu0 0.0
    %1274 = vmatprep.subr.mxu0 0.0
    %1275 = vmatpush1.msra.mxu0 0.0
    %1276 = vmatprep.subr.mxu0 0.0
    %1277 = vmatpush1.msra.mxu0 0.0
    %1278 = vmatprep.subr.mxu0 0.0
    %1279 = vmatpush1.msra.mxu0 0.0
    %1280 = vmatprep.subr.mxu0 0.0
    %1281 = vmatpush1.msra.mxu0 0.0
    %1282 = vmatprep.subr.mxu0 0.0
    %1283 = vmatpush1.msra.mxu0 0.0
    %1284 = vmatprep.subr.mxu0 0.0
    %1285 = vmatpush1.msra.mxu0 0.0
    %1286 = vmatprep.subr.mxu0 0.0
    %1287 = vmatpush1.msra.mxu0 0.0
    %1288 = vmatprep.subr.mxu0 0.0
    %1289 = vmatpush1.msra.mxu0 0.0
    %1290 = vmatprep.subr.mxu0 0.0
    %1291 = vmatpush1.msra.mxu0 0.0
    %1292 = vmatprep.subr.mxu0 0.0
    %1293 = vmatpush1.msra.mxu0 0.0
    %1294 = vmatprep.subr.mxu0 0.0
    %1295 = vmatpush1.msra.mxu0 0.0
    %1296 = vmatprep.subr.mxu0 0.0
    %1297 = vmatpush1.msra.mxu0 0.0
    %1298 = vmatprep.subr.mxu0 0.0
    %1299 = vmatpush1.msra.mxu0 0.0
    %1300 = vmatprep.mubr.f32.mxu0 0.0
    %1301 = vmatmul.mubr.f32.gmra.mrb[0].mxu0 %v1164
    %v1302 = vpop.f32.mrb[0].mxu0
    %v1303 = vadd.f32 0.0, %v1302
    %v1304 = vpop.f32.mrb[0].mxu0
    %1305 = vdwg.mxu0
    %1308 = vrot.lane.b32.xlu0 %v1013, 16
    %v1309 = vpop.permute.xlu0 %1308
    %1310 = vrot.lane.b32.xlu0 %v1014, 16
    %v1311 = vpop.permute.xlu0 %1310
    %1316 = vrot.lane.b32.xlu0 %v1233, 32
    %v1317 = vpop.permute.xlu0 %1316
    %1318 = vrot.lane.b32.xlu0 %v1303, 32
    %v1319 = vpop.permute.xlu0 %1318
    %v1322 = vsel %vm72, %v1089, %v1309
    %v1323 = vsel %vm72, %v1159, %v1311
    %v1324 = vsel %vm539, %v1322, %v1317
    %v1325 = vsel %vm539, %v1323, %v1319
    %v1326 = vld [vmem:[%s11] sm:$0xff]
    %v1327 = vld [vmem:[%s11 + $0x8] sm:$0xff]
    %v1328 = vld [vmem:[%s11 + $0x10] sm:$0xff]
    %v1329 = vld [vmem:[%s11 + $0x18] sm:$0xff]
    %v1330 = vld [vmem:[%s11 + $0x20] sm:$0xff]
    %v1331 = vld [vmem:[%s11 + $0x28] sm:$0xff]
    %v1333 = vlaneseq
    %v1334 = vshrl.u32 %v1333, 7
    %v1335 = vsub.s32 0, %v1334
    %v1336 = vrot.slane %v1015, %v1335
    %vm1338 = vcmask 392192
    %v1340 = vsel %vm1338, %v1324, 0
    %v1343 = vsel %vm1338, %v1325, 0
    %1345 = vmatprep.subr.mxu0 0.0
    %1346 = vmatpush1.msra.mxu0 %v1326
    %1347 = vmatprep.subr.mxu0 0.0
    %1348 = vmatpush1.msra.mxu0 %v1327
    %1349 = vmatprep.subr.mxu0 0.0
    %1350 = vmatpush1.msra.mxu0 %v1328
    %1351 = vmatprep.subr.mxu0 0.0
    %1352 = vmatpush1.msra.mxu0 %v1329
    %1353 = vmatprep.subr.mxu0 0.0
    %1354 = vmatpush1.msra.mxu0 %v1330
    %1355 = vmatprep.subr.mxu0 0.0
    %1356 = vmatpush1.msra.mxu0 %v1331
    %1357 = vmatprep.subr.mxu0 0.0
    %1358 = vmatpush1.msra.mxu0 0.0
    %1359 = vmatprep.subr.mxu0 0.0
    %1360 = vmatpush1.msra.mxu0 0.0
    %1361 = vmatprep.subr.mxu0 0.0
    %1362 = vmatpush1.msra.mxu0 0.0
    %1363 = vmatprep.subr.mxu0 0.0
    %1364 = vmatpush1.msra.mxu0 0.0
    %1365 = vmatprep.subr.mxu0 0.0
    %1366 = vmatpush1.msra.mxu0 0.0
    %1367 = vmatprep.subr.mxu0 0.0
    %1368 = vmatpush1.msra.mxu0 0.0
    %1369 = vmatprep.subr.mxu0 0.0
    %1370 = vmatpush1.msra.mxu0 0.0
    %1371 = vmatprep.subr.mxu0 0.0
    %1372 = vmatpush1.msra.mxu0 0.0
    %1373 = vmatprep.subr.mxu0 0.0
    %1374 = vmatpush1.msra.mxu0 0.0
    %1375 = vmatprep.subr.mxu0 0.0
    %1376 = vmatpush1.msra.mxu0 0.0
    %1377 = vmatprep.subr.mxu0 0.0
    %1378 = vmatpush1.msra.mxu0 0.0
    %1379 = vmatprep.subr.mxu0 0.0
    %1380 = vmatpush1.msra.mxu0 0.0
    %1381 = vmatprep.subr.mxu0 0.0
    %1382 = vmatpush1.msra.mxu0 0.0
    %1383 = vmatprep.subr.mxu0 0.0
    %1384 = vmatpush1.msra.mxu0 0.0
    %1385 = vmatprep.subr.mxu0 0.0
    %1386 = vmatpush1.msra.mxu0 0.0
    %1387 = vmatprep.subr.mxu0 0.0
    %1388 = vmatpush1.msra.mxu0 0.0
    %1389 = vmatprep.subr.mxu0 0.0
    %1390 = vmatpush1.msra.mxu0 0.0
    %1391 = vmatprep.subr.mxu0 0.0
    %1392 = vmatpush1.msra.mxu0 0.0
    %1393 = vmatprep.subr.mxu0 0.0
    %1394 = vmatpush1.msra.mxu0 0.0
    %1395 = vmatprep.subr.mxu0 0.0
    %1396 = vmatpush1.msra.mxu0 0.0
    %1397 = vmatprep.subr.mxu0 0.0
    %1398 = vmatpush1.msra.mxu0 0.0
    %1399 = vmatprep.subr.mxu0 0.0
    %1400 = vmatpush1.msra.mxu0 0.0
    %1401 = vmatprep.subr.mxu0 0.0
    %1402 = vmatpush1.msra.mxu0 0.0
    %1403 = vmatprep.subr.mxu0 0.0
    %1404 = vmatpush1.msra.mxu0 0.0
    %1405 = vmatprep.subr.mxu0 0.0
    %1406 = vmatpush1.msra.mxu0 0.0
    %1407 = vmatprep.subr.mxu0 0.0
    %1408 = vmatpush1.msra.mxu0 0.0
    %1409 = vmatprep.mubr.f32.mxu0 0.0
    %1410 = vmatmul.mubr.f32.gmra.mrb[0].mxu0 %v1340
    %v1411 = vpop.f32.mrb[0].mxu0
    %v1412 = vadd.f32 %v1336, %v1411
    %v1413 = vpop.f32.mrb[0].mxu0
    %1414 = vmatprep.mubr.f32.mxu0 0.0
    %1415 = vmatmul.mubr.f32.gmra.mrb[0].mxu0 %v1343
    %v1416 = vpop.f32.mrb[0].mxu0
    %v1417 = vadd.f32 %v1336, %v1416
    %v1418 = vpop.f32.mrb[0].mxu0
    %1419 = vdwg.mxu0
    %v1420 = vsel %vm72, 1.0, 0
    %1422 = vmatprep.subr.mxu0 0.0
    %1423 = vmatpush1.msra.mxu0 %v1412
    %1424 = vmatprep.subr.mxu0 0.0
    %1425 = vmatpush1.msra.mxu0 %v1417
    %1426 = vmatprep.subr.mxu0 0.0
    %1427 = vmatpush1.msra.mxu0 0.0
    %1428 = vmatprep.subr.mxu0 0.0
    %1429 = vmatpush1.msra.mxu0 0.0
    %1430 = vmatprep.subr.mxu0 0.0
    %1431 = vmatpush1.msra.mxu0 0.0
    %1432 = vmatprep.subr.mxu0 0.0
    %1433 = vmatpush1.msra.mxu0 0.0
    %1434 = vmatprep.subr.mxu0 0.0
    %1435 = vmatpush1.msra.mxu0 0.0
    %1436 = vmatprep.subr.mxu0 0.0
    %1437 = vmatpush1.msra.mxu0 0.0
    %1438 = vmatprep.subr.mxu0 0.0
    %1439 = vmatpush1.msra.mxu0 0.0
    %1440 = vmatprep.subr.mxu0 0.0
    %1441 = vmatpush1.msra.mxu0 0.0
    %1442 = vmatprep.subr.mxu0 0.0
    %1443 = vmatpush1.msra.mxu0 0.0
    %1444 = vmatprep.subr.mxu0 0.0
    %1445 = vmatpush1.msra.mxu0 0.0
    %1446 = vmatprep.subr.mxu0 0.0
    %1447 = vmatpush1.msra.mxu0 0.0
    %1448 = vmatprep.subr.mxu0 0.0
    %1449 = vmatpush1.msra.mxu0 0.0
    %1450 = vmatprep.subr.mxu0 0.0
    %1451 = vmatpush1.msra.mxu0 0.0
    %1452 = vmatprep.subr.mxu0 0.0
    %1453 = vmatpush1.msra.mxu0 0.0
    %1454 = vmatprep.subr.mxu0 0.0
    %1455 = vmatpush1.msra.mxu0 0.0
    %1456 = vmatprep.subr.mxu0 0.0
    %1457 = vmatpush1.msra.mxu0 0.0
    %1458 = vmatprep.subr.mxu0 0.0
    %1459 = vmatpush1.msra.mxu0 0.0
    %1460 = vmatprep.subr.mxu0 0.0
    %1461 = vmatpush1.msra.mxu0 0.0
    %1462 = vmatprep.subr.mxu0 0.0
    %1463 = vmatpush1.msra.mxu0 0.0
    %1464 = vmatprep.subr.mxu0 0.0
    %1465 = vmatpush1.msra.mxu0 0.0
    %1466 = vmatprep.subr.mxu0 0.0
    %1467 = vmatpush1.msra.mxu0 0.0
    %1468 = vmatprep.subr.mxu0 0.0
    %1469 = vmatpush1.msra.mxu0 0.0
    %1470 = vmatprep.subr.mxu0 0.0
    %1471 = vmatpush1.msra.mxu0 0.0
    %1472 = vmatprep.subr.mxu0 0.0
    %1473 = vmatpush1.msra.mxu0 0.0
    %1474 = vmatprep.subr.mxu0 0.0
    %1475 = vmatpush1.msra.mxu0 0.0
    %1476 = vmatprep.subr.mxu0 0.0
    %1477 = vmatpush1.msra.mxu0 0.0
    %1478 = vmatprep.subr.mxu0 0.0
    %1479 = vmatpush1.msra.mxu0 0.0
    %1480 = vmatprep.subr.mxu0 0.0
    %1481 = vmatpush1.msra.mxu0 0.0
    %1482 = vmatprep.subr.mxu0 0.0
    %1483 = vmatpush1.msra.mxu0 0.0
    %1484 = vmatprep.subr.mxu0 0.0
    %1485 = vmatpush1.msra.mxu0 0.0
    %1486 = vmatprep.mubr.f32.mxu0 0.0
    %1487 = vmatmul.mubr.f32.gmra.mrb[0].mxu0 %v1420
    %v1488 = vpop.f32.mrb[0].mxu0
    %v1489 = vadd.f32 0.0, %v1488
    %v1490 = vpop.f32.mrb[0].mxu0
    %1491 = vdwg.mxu0
    %v1492 = vmul.f32 %v1489, 0.0625
    %v1493 = vmul.f32 %v1412, %v1412
    %v1494 = vmul.f32 %v1417, %v1417
    %1495 = vmatprep.subr.mxu0 0.0
    %1496 = vmatpush1.msra.mxu0 %v1493
    %1497 = vmatprep.subr.mxu0 0.0
    %1498 = vmatpush1.msra.mxu0 %v1494
    %1499 = vmatprep.subr.mxu0 0.0
    %1500 = vmatpush1.msra.mxu0 0.0
    %1501 = vmatprep.subr.mxu0 0.0
    %1502 = vmatpush1.msra.mxu0 0.0
    %1503 = vmatprep.subr.mxu0 0.0
    %1504 = vmatpush1.msra.mxu0 0.0
    %1505 = vmatprep.subr.mxu0 0.0
    %1506 = vmatpush1.msra.mxu0 0.0
    %1507 = vmatprep.subr.mxu0 0.0
    %1508 = vmatpush1.msra.mxu0 0.0
    %1509 = vmatprep.subr.mxu0 0.0
    %1510 = vmatpush1.msra.mxu0 0.0
    %1511 = vmatprep.subr.mxu0 0.0
    %1512 = vmatpush1.msra.mxu0 0.0
    %1513 = vmatprep.subr.mxu0 0.0
    %1514 = vmatpush1.msra.mxu0 0.0
    %1515 = vmatprep.subr.mxu0 0.0
    %1516 = vmatpush1.msra.mxu0 0.0
    %1517 = vmatprep.subr.mxu0 0.0
    %1518 = vmatpush1.msra.mxu0 0.0
    %1519 = vmatprep.subr.mxu0 0.0
    %1520 = vmatpush1.msra.mxu0 0.0
    %1521 = vmatprep.subr.mxu0 0.0
    %1522 = vmatpush1.msra.mxu0 0.0
    %1523 = vmatprep.subr.mxu0 0.0
    %1524 = vmatpush1.msra.mxu0 0.0
    %1525 = vmatprep.subr.mxu0 0.0
    %1526 = vmatpush1.msra.mxu0 0.0
    %1527 = vmatprep.subr.mxu0 0.0
    %1528 = vmatpush1.msra.mxu0 0.0
    %1529 = vmatprep.subr.mxu0 0.0
    %1530 = vmatpush1.msra.mxu0 0.0
    %1531 = vmatprep.subr.mxu0 0.0
    %1532 = vmatpush1.msra.mxu0 0.0
    %1533 = vmatprep.subr.mxu0 0.0
    %1534 = vmatpush1.msra.mxu0 0.0
    %1535 = vmatprep.subr.mxu0 0.0
    %1536 = vmatpush1.msra.mxu0 0.0
    %1537 = vmatprep.subr.mxu0 0.0
    %1538 = vmatpush1.msra.mxu0 0.0
    %1539 = vmatprep.subr.mxu0 0.0
    %1540 = vmatpush1.msra.mxu0 0.0
    %1541 = vmatprep.subr.mxu0 0.0
    %1542 = vmatpush1.msra.mxu0 0.0
    %1543 = vmatprep.subr.mxu0 0.0
    %1544 = vmatpush1.msra.mxu0 0.0
    %1545 = vmatprep.subr.mxu0 0.0
    %1546 = vmatpush1.msra.mxu0 0.0
    %1547 = vmatprep.subr.mxu0 0.0
    %1548 = vmatpush1.msra.mxu0 0.0
    %1549 = vmatprep.subr.mxu0 0.0
    %1550 = vmatpush1.msra.mxu0 0.0
    %1551 = vmatprep.subr.mxu0 0.0
    %1552 = vmatpush1.msra.mxu0 0.0
    %1553 = vmatprep.subr.mxu0 0.0
    %1554 = vmatpush1.msra.mxu0 0.0
    %1555 = vmatprep.subr.mxu0 0.0
    %1556 = vmatpush1.msra.mxu0 0.0
    %1557 = vmatprep.subr.mxu0 0.0
    %1558 = vmatpush1.msra.mxu0 0.0
    %1559 = vmatprep.mubr.f32.mxu0 0.0
    %1560 = vmatmul.mubr.f32.gmra.mrb[0].mxu0 %v1420
    %v1561 = vpop.f32.mrb[0].mxu0
    %v1562 = vadd.f32 0.0, %v1561
    %v1563 = vpop.f32.mrb[0].mxu0
    %1564 = vdwg.mxu0
    %v1565 = vmul.f32 %v1562, 0.0625
    %v1566 = vmul.f32 %v1492, %v1492
    %v1567 = vsub.f32 %v1565, %v1566
    %v1568 = vmax.f32 %v1567, 0.0
    %v1569 = vadd.f32 %v1568, 1e-05
    %v1570 = vrsqrt.pop %v1569
    %v1571 = vmul.f32 %v1570, %v1016
    %v1572 = vlaneseq
    %v1573 = vshrl.u32 %v1572, 7
    %v1574 = vsub.s32 0, %v1573
    %v1575 = vrot.slane %v1492, %v1574
    %v1576 = vsub.f32 %v1412, %v1575
    %v1577 = vsub.f32 %v1417, %v1575
    %v1578 = vlaneseq
    %v1579 = vshrl.u32 %v1578, 7
    %v1580 = vsub.s32 0, %v1579
    %v1581 = vrot.slane %v1571, %v1580
    %v1582 = vmul.f32 %v1576, %v1581
    %v1583 = vmul.f32 %v1577, %v1581
    %v1585 = vlaneseq
    %v1586 = vshrl.u32 %v1585, 7
    %v1587 = vsub.s32 0, %v1586
    %v1588 = vrot.slane %v1017, %v1587
    %v1590 = vadd.f32 %v1582, %v1588
    %v1591 = vadd.f32 %v1583, %v1588
    %v1592 = vmax.f32 %v1590, 0.0
    %v1593 = vmax.f32 %v1591, 0.0
    %v1596 = vrot.slane %v1592, 1
    %v1597 = vrot.slane %v1593, 1
    %1598 = vrot.lane.b32.xlu0 %v1596, 32
    %v1599 = vpop.permute.xlu0 %1598
    %1600 = vrot.lane.b32.xlu0 %v1597, 32
    %v1601 = vpop.permute.xlu0 %1600
    %v1604 = vrot.slane %v1592, 2
    %v1605 = vrot.slane %v1593, 2
    %1606 = vrot.lane.b32.xlu0 %v1604, 64
    %v1607 = vpop.permute.xlu0 %1606
    %1608 = vrot.lane.b32.xlu0 %v1605, 64
    %v1609 = vpop.permute.xlu0 %1608
    %v1612 = vrot.slane %v1592, 3
    %v1613 = vrot.slane %v1593, 3
    %1614 = vrot.lane.b32.xlu0 %v1612, 96
    %v1615 = vpop.permute.xlu0 %1614
    %1616 = vrot.lane.b32.xlu0 %v1613, 96
    %v1617 = vpop.permute.xlu0 %1616
    %v1620 = vrot.slane %v1592, 4
    %v1621 = vrot.slane %v1593, 4
    %v1624 = vrot.slane %v1592, 5
    %v1625 = vrot.slane %v1593, 5
    %1626 = vrot.lane.b32.xlu0 %v1624, 32
    %v1627 = vpop.permute.xlu0 %1626
    %1628 = vrot.lane.b32.xlu0 %v1625, 32
    %v1629 = vpop.permute.xlu0 %1628
    %v1632 = vrot.slane %v1592, 6
    %v1633 = vrot.slane %v1593, 6
    %1634 = vrot.lane.b32.xlu0 %v1632, 64
    %v1635 = vpop.permute.xlu0 %1634
    %1636 = vrot.lane.b32.xlu0 %v1633, 64
    %v1637 = vpop.permute.xlu0 %1636
    %v1640 = vrot.slane %v1592, 7
    %v1641 = vrot.slane %v1593, 7
    %1642 = vrot.lane.b32.xlu0 %v1640, 96
    %v1643 = vpop.permute.xlu0 %1642
    %1644 = vrot.lane.b32.xlu0 %v1641, 96
    %v1645 = vpop.permute.xlu0 %1644
    %v1648 = vsel %vm539, %v1592, %v1599
    %v1649 = vsel %vm539, %v1593, %v1601
    %vm1650 = vcmask 523264
    %v1651 = vsel %vm1650, %v1648, %v1607
    %v1652 = vsel %vm1650, %v1649, %v1609
    %vm1653 = vcmask 785408
    %v1654 = vsel %vm1653, %v1651, %v1615
    %v1655 = vsel %vm1653, %v1652, %v1617
    %v1656 = vsel %vm539, %v1620, %v1627
    %v1657 = vsel %vm539, %v1621, %v1629
    %v1658 = vsel %vm1650, %v1656, %v1635
    %v1659 = vsel %vm1650, %v1657, %v1637
    %v1660 = vsel %vm1653, %v1658, %v1643
    %v1661 = vsel %vm1653, %v1659, %v1645
    %v1662 = vld [vmem:[%s15] sm:$0xff]
    %v1663 = vld [vmem:[%s15 + $0x8] sm:$0xff]
    %v1664 = vld [vmem:[%s15 + $0x10] sm:$0xff]
    %v1665 = vld [vmem:[%s15 + $0x18] sm:$0xff]
    %v1666 = vld [vmem:[%s15 + $0x20] sm:$0xff]
    %v1667 = vld [vmem:[%s15 + $0x28] sm:$0xff]
    %v1668 = vld [vmem:[%s15 + $0x30] sm:$0xff]
    %v1669 = vld [vmem:[%s15 + $0x38] sm:$0xff]
    %v1670 = vld [vmem:[%s15 + $0x40] sm:$0xff]
    %v1671 = vld [vmem:[%s15 + $0x48] sm:$0xff]
    %v1672 = vld [vmem:[%s15 + $0x50] sm:$0xff]
    %v1673 = vld [vmem:[%s15 + $0x58] sm:$0xff]
    %v1674 = vld [vmem:[%s15 + $0x60] sm:$0xff]
    %v1675 = vld [vmem:[%s15 + $0x68] sm:$0xff]
    %v1676 = vld [vmem:[%s15 + $0x70] sm:$0xff]
    %v1677 = vld [vmem:[%s15 + $0x78] sm:$0xff]
    %v1678 = vld [vmem:[%s15 + $0x80] sm:$0xff]
    %v1679 = vld [vmem:[%s15 + $0x88] sm:$0xff]
    %v1680 = vld [vmem:[%s15 + $0x90] sm:$0xff]
    %v1681 = vld [vmem:[%s15 + $0x98] sm:$0xff]
    %v1682 = vld [vmem:[%s15 + $0xa0] sm:$0xff]
    %v1683 = vld [vmem:[%s15 + $0xa8] sm:$0xff]
    %v1684 = vld [vmem:[%s15 + $0xb0] sm:$0xff]
    %v1685 = vld [vmem:[%s15 + $0xb8] sm:$0xff]
    %v1686 = vld [vmem:[%s15 + $0xc0] sm:$0xff]
    %v1687 = vld [vmem:[%s15 + $0xc8] sm:$0xff]
    %v1688 = vld [vmem:[%s15 + $0xd0] sm:$0xff]
    %v1689 = vld [vmem:[%s15 + $0xd8] sm:$0xff]
    %v1690 = vld [vmem:[%s15 + $0xe0] sm:$0xff]
    %v1691 = vld [vmem:[%s15 + $0xe8] sm:$0xff]
    %v1692 = vld [vmem:[%s15 + $0xf0] sm:$0xff]
    %v1693 = vld [vmem:[%s15 + $0xf8] sm:$0xff]
    %v1694 = vld [vmem:[%s16] sm:$0x1]
    %v1696 = vlaneseq
    %v1697 = vshrl.u32 %v1696, 7
    %v1698 = vsub.s32 0, %v1697
    %v1699 = vrot.slane %v1694, %v1698
    %v1705 = vrot.slane %v1655, 7
    %vm1706 = vcmask 1041409
    %v1707 = vsel %vm1706, %v1705, %v1654
    %v1708 = vrot.slane %v1661, 7
    %v1709 = vsel %vm1706, %v1708, %v1660
    %1712 = vmatprep.subr.mxu0 0.0
    %1713 = vmatpush1.msra.mxu0 %v1662
    %1714 = vmatprep.subr.mxu0 0.0
    %1715 = vmatpush1.msra.mxu0 %v1663
    %1716 = vmatprep.subr.mxu0 0.0
    %1717 = vmatpush1.msra.mxu0 %v1664
    %1718 = vmatprep.subr.mxu0 0.0
    %1719 = vmatpush1.msra.mxu0 %v1665
    %1720 = vmatprep.subr.mxu0 0.0
    %1721 = vmatpush1.msra.mxu0 %v1666
    %1722 = vmatprep.subr.mxu0 0.0
    %1723 = vmatpush1.msra.mxu0 %v1667
    %1724 = vmatprep.subr.mxu0 0.0
    %1725 = vmatpush1.msra.mxu0 %v1668
    %1726 = vmatprep.subr.mxu0 0.0
    %1727 = vmatpush1.msra.mxu0 %v1669
    %1728 = vmatprep.subr.mxu0 0.0
    %1729 = vmatpush1.msra.mxu0 %v1670
    %1730 = vmatprep.subr.mxu0 0.0
    %1731 = vmatpush1.msra.mxu0 %v1671
    %1732 = vmatprep.subr.mxu0 0.0
    %1733 = vmatpush1.msra.mxu0 %v1672
    %1734 = vmatprep.subr.mxu0 0.0
    %1735 = vmatpush1.msra.mxu0 %v1673
    %1736 = vmatprep.subr.mxu0 0.0
    %1737 = vmatpush1.msra.mxu0 %v1674
    %1738 = vmatprep.subr.mxu0 0.0
    %1739 = vmatpush1.msra.mxu0 %v1675
    %1740 = vmatprep.subr.mxu0 0.0
    %1741 = vmatpush1.msra.mxu0 %v1676
    %1742 = vmatprep.subr.mxu0 0.0
    %1743 = vmatpush1.msra.mxu0 %v1677
    %1744 = vmatprep.subr.mxu0 0.0
    %1745 = vmatpush1.msra.mxu0 %v1678
    %1746 = vmatprep.subr.mxu0 0.0
    %1747 = vmatpush1.msra.mxu0 %v1679
    %1748 = vmatprep.subr.mxu0 0.0
    %1749 = vmatpush1.msra.mxu0 %v1680
    %1750 = vmatprep.subr.mxu0 0.0
    %1751 = vmatpush1.msra.mxu0 %v1681
    %1752 = vmatprep.subr.mxu0 0.0
    %1753 = vmatpush1.msra.mxu0 %v1682
    %1754 = vmatprep.subr.mxu0 0.0
    %1755 = vmatpush1.msra.mxu0 %v1683
    %1756 = vmatprep.subr.mxu0 0.0
    %1757 = vmatpush1.msra.mxu0 %v1684
    %1758 = vmatprep.subr.mxu0 0.0
    %1759 = vmatpush1.msra.mxu0 %v1685
    %1760 = vmatprep.subr.mxu0 0.0
    %1761 = vmatpush1.msra.mxu0 %v1686
    %1762 = vmatprep.subr.mxu0 0.0
    %1763 = vmatpush1.msra.mxu0 %v1687
    %1764 = vmatprep.subr.mxu0 0.0
    %1765 = vmatpush1.msra.mxu0 %v1688
    %1766 = vmatprep.subr.mxu0 0.0
    %1767 = vmatpush1.msra.mxu0 %v1689
    %1768 = vmatprep.subr.mxu0 0.0
    %1769 = vmatpush1.msra.mxu0 %v1690
    %1770 = vmatprep.subr.mxu0 0.0
    %1771 = vmatpush1.msra.mxu0 %v1691
    %1772 = vmatprep.subr.mxu0 0.0
    %1773 = vmatpush1.msra.mxu0 %v1692
    %1774 = vmatprep.subr.mxu0 0.0
    %1775 = vmatpush1.msra.mxu0 %v1693
    %1776 = vmatprep.mubr.f32.mxu0 %v1709
    %1777 = vmatmul.mubr.f32.gmra.mrb[0].mxu0 %v1707
    %v1778 = vpop.f32.mrb[0].mxu0
    %v1779 = vadd.f32 %v1699, %v1778
    %v1780 = vpop.f32.mrb[0].mxu0
    %1781 = vdwg.mxu0
    %v1782 = vmax.f32 %v1779, 0.0
    %v1783 = vld [vmem:[%s17] sm:$0xff]
    %v1784 = vld [vmem:[%s17 + $0x8] sm:$0xff]
    %v1785 = vld [vmem:[%s17 + $0x10] sm:$0xff]
    %v1786 = vld [vmem:[%s17 + $0x18] sm:$0xff]
    %v1787 = vld [vmem:[%s17 + $0x20] sm:$0xff]
    %v1788 = vld [vmem:[%s17 + $0x28] sm:$0xff]
    %v1789 = vld [vmem:[%s17 + $0x30] sm:$0xff]
    %v1790 = vld [vmem:[%s17 + $0x38] sm:$0xff]
    %v1791 = vld [vmem:[%s18] sm:$0x1]
    %v1793 = vlaneseq
    %v1794 = vshrl.u32 %v1793, 7
    %v1795 = vsub.s32 0, %v1794
    %v1796 = vrot.slane %v1791, %v1795
    %v1799 = vsel %vm1650, %v1782, 0
    %1801 = vmatprep.subr.mxu0 0.0
    %1802 = vmatpush1.msra.mxu0 %v1783
    %1803 = vmatprep.subr.mxu0 0.0
    %1804 = vmatpush1.msra.mxu0 %v1784
    %1805 = vmatprep.subr.mxu0 0.0
    %1806 = vmatpush1.msra.mxu0 %v1785
    %1807 = vmatprep.subr.mxu0 0.0
    %1808 = vmatpush1.msra.mxu0 %v1786
    %1809 = vmatprep.subr.mxu0 0.0
    %1810 = vmatpush1.msra.mxu0 %v1787
    %1811 = vmatprep.subr.mxu0 0.0
    %1812 = vmatpush1.msra.mxu0 %v1788
    %1813 = vmatprep.subr.mxu0 0.0
    %1814 = vmatpush1.msra.mxu0 %v1789
    %1815 = vmatprep.subr.mxu0 0.0
    %1816 = vmatpush1.msra.mxu0 %v1790
    %1817 = vmatprep.subr.mxu0 0.0
    %1818 = vmatpush1.msra.mxu0 0.0
    %1819 = vmatprep.subr.mxu0 0.0
    %1820 = vmatpush1.msra.mxu0 0.0
    %1821 = vmatprep.subr.mxu0 0.0
    %1822 = vmatpush1.msra.mxu0 0.0
    %1823 = vmatprep.subr.mxu0 0.0
    %1824 = vmatpush1.msra.mxu0 0.0
    %1825 = vmatprep.subr.mxu0 0.0
    %1826 = vmatpush1.msra.mxu0 0.0
    %1827 = vmatprep.subr.mxu0 0.0
    %1828 = vmatpush1.msra.mxu0 0.0
    %1829 = vmatprep.subr.mxu0 0.0
    %1830 = vmatpush1.msra.mxu0 0.0
    %1831 = vmatprep.subr.mxu0 0.0
    %1832 = vmatpush1.msra.mxu0 0.0
    %1833 = vmatprep.subr.mxu0 0.0
    %1834 = vmatpush1.msra.mxu0 0.0
    %1835 = vmatprep.subr.mxu0 0.0
    %1836 = vmatpush1.msra.mxu0 0.0
    %1837 = vmatprep.subr.mxu0 0.0
    %1838 = vmatpush1.msra.mxu0 0.0
    %1839 = vmatprep.subr.mxu0 0.0
    %1840 = vmatpush1.msra.mxu0 0.0
    %1841 = vmatprep.subr.mxu0 0.0
    %1842 = vmatpush1.msra.mxu0 0.0
    %1843 = vmatprep.subr.mxu0 0.0
    %1844 = vmatpush1.msra.mxu0 0.0
    %1845 = vmatprep.subr.mxu0 0.0
    %1846 = vmatpush1.msra.mxu0 0.0
    %1847 = vmatprep.subr.mxu0 0.0
    %1848 = vmatpush1.msra.mxu0 0.0
    %1849 = vmatprep.subr.mxu0 0.0
    %1850 = vmatpush1.msra.mxu0 0.0
    %1851 = vmatprep.subr.mxu0 0.0
    %1852 = vmatpush1.msra.mxu0 0.0
    %1853 = vmatprep.subr.mxu0 0.0
    %1854 = vmatpush1.msra.mxu0 0.0
    %1855 = vmatprep.subr.mxu0 0.0
    %1856 = vmatpush1.msra.mxu0 0.0
    %1857 = vmatprep.subr.mxu0 0.0
    %1858 = vmatpush1.msra.mxu0 0.0
    %1859 = vmatprep.subr.mxu0 0.0
    %1860 = vmatpush1.msra.mxu0 0.0
    %1861 = vmatprep.subr.mxu0 0.0
    %1862 = vmatpush1.msra.mxu0 0.0
    %1863 = vmatprep.subr.mxu0 0.0
    %1864 = vmatpush1.msra.mxu0 0.0
    %1865 = vmatprep.mubr.f32.mxu0 0.0
    %1866 = vmatmul.mubr.f32.gmra.mrb[0].mxu0 %v1799
    %v1867 = vpop.f32.mrb[0].mxu0
    %v1868 = vadd.f32 %v1796, %v1867
    %v1869 = vpop.f32.mrb[0].mxu0
    %1870 = vdwg.mxu0
    %vm1871 = vcmask 17408
    %1872 = vst.msk [vmem:[#allocation2] sm:$0x3] %vm1871, %v1868
    // Predicated region
    $region78: #{tpu_custom_call.1} parent=1 // pred_check
      _
    $region79: #{tpu_custom_call.1} parent=1 // pred_check_branch
      %1874 = sbr.rel (0) target = $region81
    $region80: #{tpu_custom_call.1} parent=1 // pred_region
      %s1876 = ssub.s32 32, 32
      %1877 = vsyncadd [#allocation3], %s1876
      %s1879 = sshll.u32 [#allocation2], 4
      %s1880 = int_to_ptr.vmem [resolvable:$true] %s1879
      %1882 = dma.vmem_to_hbm [thread:$0]  %s1880, 32, %s19, [#allocation3]
    $region81: #{tpu_custom_call.1} parent=1 // pred_fallthru
      _
    // Predicated region
    $region82: #{tpu_custom_call.1} parent=1 // pred_check
      _
    $region83: #{tpu_custom_call.1} parent=1 // pred_check_branch
      %1884 = sbr.rel (0) target = $region85
    $region84: #{tpu_custom_call.1} parent=1 // pred_region
      %1885 = dma.done [#allocation3], 32
    $region85: #{tpu_custom_call.1} parent=1 // pred_fallthru
      _
    %1886 = vsyncpa [#allocation3], 1

</llo_original>
